<compile_context>
chip_gen: v7x
topology: tpu7x:2x2x1
jax: 0.10.0
libtpu: 0.0.40
codegen_flags: <defaults>
</compile_context>

<pallas_src>
import functools

import numpy as np
import jax
import jax.numpy as jnp
from jax import lax
from jax.experimental import pallas as pl
from jax.experimental.pallas import tpu as pltpu


def _conv3x3_taps(inp, w_ref, H, W, mask_l, mask_r):
    """3x3 SAME stride-1 conv of `inp` laid out as (C, H*W).

    out[co, p] = sum_t sum_ci w_ref[t, co, ci] * shift_t(inp)[ci, p]

    The spatial shift of each tap is a static lane-slice of a zero-padded copy
    of `inp` (handles the top/bottom image edges) plus a row-boundary lane mask
    (handles the left/right image edges).  No dense shift matrices, no wasted
    MXU work.
    """
    C, HW = inp.shape
    # Pad enough lanes on each side to cover the largest tap offset (W + 1),
    # rounded up to a multiple of 128 so the concatenate pieces stay aligned.
    P = ((W + 1 + 127) // 128) * 128
    zpad = jnp.zeros((C, P), inp.dtype)
    xp = jnp.concatenate([zpad, inp, zpad], axis=1)          # (C, HW + 2P)

    out = None
    for kh in range(3):                                      # static unroll, 9 taps
        for kw in range(3):
            t = kh * 3 + kw
            dh, dw = kh - 1, kw - 1
            off = dh * W + dw
            s = xp[:, P + off: P + off + HW]                 # (C, HW) static slice
            # Zero positions whose source pixel fell off the end of a row
            # (top/bottom rows are already zero via the padding).
            if dw == -1:
                s = s * mask_l
            elif dw == 1:
                s = s * mask_r
            part = jnp.dot(w_ref[t], s,                      # (Cout, HW)
                           preferred_element_type=jnp.float32)
            out = part if out is None else out + part        # no zero-init acc
    return out


def _fixup_block_kernel(scal_ref, x_ref, w1_ref, w2_ref, o_ref, *, H, W):
    # scal_ref : SMEM (5,)            = [bias1a, bias1b, bias2a, bias2b, scale]
    # x_ref    : VMEM (1, Cin, HW)    flattened NCHW, HW on lanes (lane-dense)
    # w1_ref   : VMEM (9, Cmid, Cin)  conv1 weight, tap-major, per-tap (Cout, Cin)
    # w2_ref   : VMEM (9, Cmid, Cmid) conv2 weight, tap-major
    # o_ref    : VMEM (1, Cmid, HW)   flattened NCHW output
    b1a = scal_ref[0]
    b1b = scal_ref[1]
    b2a = scal_ref[2]
    b2b = scal_ref[3]
    scale = scal_ref[4]

    HW = H * W
    x = x_ref[0]                                             # (Cin, HW) f32

    # Row-edge masks, hoisted: computed once, reused by both convs.
    col = lax.broadcasted_iota(jnp.int32, (1, HW), 1) % W    # w coordinate per lane
    mask_l = jnp.where(col >= 1, 1.0, 0.0).astype(x.dtype)   # source pixel w-1 exists
    mask_r = jnp.where(col <= W - 2, 1.0, 0.0).astype(x.dtype)  # source pixel w+1 exists

    out = _conv3x3_taps(x + b1a, w1_ref, H, W, mask_l, mask_r)    # conv1(bias1a(x))
    out = jnp.maximum(out + b1b, 0.0)                             # relu(bias1b(out))
    out = _conv3x3_taps(out + b2a, w2_ref, H, W, mask_l, mask_r)  # conv2(bias2a(out))
    out = out * scale + b2b                                       # bias2b(scale(out))
    o_ref[0] = jnp.maximum(out + x, 0.0)                          # += identity; relu


def fixup_basic_block(x_nchw, scalars, w1_hwio, w2_hwio):
    """Forward of FixupBasicBlock with stride=1, downsample=None.

    x_nchw  : (N, C, H, W) float32
    scalars : (5,) float32  = [bias1a, bias1b, bias2a, bias2b, scale]
    w1_hwio : (3, 3, Cin, Cmid) float32  (conv1 weight, HWIO)
    w2_hwio : (3, 3, Cmid, Cmid) float32 (conv2 weight, HWIO)
    returns : (N, Cmid, H, W) float32
    """
    # TODO(synk): the `downsample is not None` branch (external module + channel
    # zero-concat) and stride != 1 are not implemented; this matches the default
    # FixupBasicBlock(inplanes, planes) configuration.
    N, C, H, W = x_nchw.shape
    HW = H * W
    Cmid = w1_hwio.shape[3]
    assert w1_hwio.shape == (3, 3, C, Cmid) and w2_hwio.shape == (3, 3, Cmid, Cmid)
    assert C == Cmid, "residual add requires Cin == Cmid (downsample=None case)"

    # (N, C, HW) is flattened NCHW: pure reshape, no transpose glue.
    x_flat = x_nchw.reshape(N, C, HW)
    # Tap-major weights: w_taps[t, co, ci] = w_hwio[kh, kw, ci, co], t = kh*3+kw.
    w1_taps = jnp.transpose(w1_hwio, (0, 1, 3, 2)).reshape(9, Cmid, C)
    w2_taps = jnp.transpose(w2_hwio, (0, 1, 3, 2)).reshape(9, Cmid, Cmid)

    kernel = functools.partial(_fixup_block_kernel, H=H, W=W)
    out = pl.pallas_call(
        kernel,
        out_shape=jax.ShapeDtypeStruct((N, Cmid, HW), jnp.float32),
        grid=(N,),
        in_specs=[
            pl.BlockSpec(memory_space=pltpu.SMEM),                # scalars
            pl.BlockSpec((1, C, HW), lambda n: (n, 0, 0)),        # x, one image/step
            pl.BlockSpec((9, Cmid, C), lambda n: (0, 0, 0)),      # conv1 taps (invariant)
            pl.BlockSpec((9, Cmid, Cmid), lambda n: (0, 0, 0)),   # conv2 taps (invariant)
        ],
        out_specs=pl.BlockSpec((1, Cmid, HW), lambda n: (n, 0, 0)),
        compiler_params=pltpu.CompilerParams(
            dimension_semantics=("parallel",)),
    )(scalars, x_flat, w1_taps, w2_taps)

    return out.reshape(N, Cmid, H, W)                             # pure reshape back


def fixup_basic_block_ref(x_nchw, scalars, w1_hwio, w2_hwio):
    """Pure-JAX reference (mirrors the PyTorch forward exactly)."""
    b1a, b1b, b2a, b2b, scale = [scalars[i] for i in range(5)]
    x = jnp.transpose(x_nchw, (0, 2, 3, 1))  # NHWC
    dn = ("NHWC", "HWIO", "NHWC")
    biased_x = x + b1a
    out = lax.conv_general_dilated(biased_x, w1_hwio, (1, 1), "SAME",
                                   dimension_numbers=dn)
    out = jnp.maximum(out + b1b, 0.0)
    out = lax.conv_general_dilated(out + b2a, w2_hwio, (1, 1), "SAME",
                                   dimension_numbers=dn)
    out = out * scale + b2b
    out = jnp.maximum(out + x, 0.0)
    return jnp.transpose(out, (0, 3, 1, 2))


if __name__ == "__main__":
    N, C, H, W = 2, 4, 16, 16       # inplanes = planes = 4, stride = 1
    Cmid = C

    key = jax.random.PRNGKey(0)
    kx, kw1, kw2 = jax.random.split(key, 3)
    x = jax.random.normal(kx, (N, C, H, W), jnp.float32)
    # Deterministic synthetic parameters (shapes from the module __init__).
    w1 = jax.random.normal(kw1, (3, 3, C, Cmid), jnp.float32) * 0.2
    w2 = jax.random.normal(kw2, (3, 3, Cmid, Cmid), jnp.float32) * 0.2
    # [bias1a, bias1b, bias2a, bias2b, scale]
    scalars = jnp.array([0.10, -0.05, 0.07, 0.02, 1.30], jnp.float32)

    out = jax.block_until_ready(fixup_basic_block(x, scalars, w1, w2))
    ref = jax.block_until_ready(fixup_basic_block_ref(x, scalars, w1, w2))
    np.testing.assert_allclose(np.asarray(out), np.asarray(ref),
                               rtol=5e-2, atol=5e-2)

    print("KERNEL_OK")
</pallas_src>

<mosaic_0001>
module attributes {stable_mosaic.version = 11 : i64} {
  func.func @_fixup_block_kernel(%arg0: i32, %arg1: memref<5xf32, #tpu.memory_space<smem>>, %arg2: memref<1x4x256xf32, #tpu.memory_space<vmem>>, %arg3: memref<9x4x4xf32, #tpu.memory_space<vmem>>, %arg4: memref<9x4x4xf32, #tpu.memory_space<vmem>>, %arg5: memref<1x4x256xf32, #tpu.memory_space<vmem>>) attributes {dimension_semantics = [#tpu.dimension_semantics<parallel>], iteration_bounds = array<i64: 2>, scalar_prefetch = 0 : i64, scratch_operands = 0 : i64, tpu.core_type = #tpu.core_type<tc>, window_params = [{transform_indices = @transform_0, window_bounds = array<i64: 5>}, {transform_indices = @transform_1, window_bounds = array<i64: 1, 4, 256>}, {pipeline_mode = #tpu.pipeline_mode<synchronous>, transform_indices = @transform_2, window_bounds = array<i64: 9, 4, 4>}, {pipeline_mode = #tpu.pipeline_mode<synchronous>, transform_indices = @transform_3, window_bounds = array<i64: 9, 4, 4>}, {transform_indices = @transform_4, window_bounds = array<i64: 1, 4, 256>}]} {
    %c0 = arith.constant 0 : index
    %0 = memref.load %arg1[%c0] : memref<5xf32, #tpu.memory_space<smem>>
    %c1 = arith.constant 1 : index
    %1 = memref.load %arg1[%c1] : memref<5xf32, #tpu.memory_space<smem>>
    %c2 = arith.constant 2 : index
    %2 = memref.load %arg1[%c2] : memref<5xf32, #tpu.memory_space<smem>>
    %c3 = arith.constant 3 : index
    %3 = memref.load %arg1[%c3] : memref<5xf32, #tpu.memory_space<smem>>
    %c4 = arith.constant 4 : index
    %4 = memref.load %arg1[%c4] : memref<5xf32, #tpu.memory_space<smem>>
    %c0_0 = arith.constant 0 : index
    %c0_1 = arith.constant 0 : index
    %c0_2 = arith.constant 0 : index
    %5 = vector.load %arg2[%c0_0, %c0_1, %c0_2] : memref<1x4x256xf32, #tpu.memory_space<vmem>>, vector<1x4x256xf32>
    %6 = vector.shape_cast %5 : vector<1x4x256xf32> to vector<4x256xf32>
    %7 = tpu.iota {dimensions = array<i32: 1>} : vector<1x256xi32>
    %c16_i32 = arith.constant 16 : i32
    %c0_i32 = arith.constant 0 : i32
    %8 = arith.cmpi eq, %c16_i32, %c0_i32 : i32
    %c1_i32 = arith.constant 1 : i32
    %9 = arith.select %8, %c1_i32, %c16_i32 : i32
    %10 = vector.broadcast %9 : i32 to vector<1x256xi32>
    %11 = arith.remsi %7, %10 : vector<1x256xi32>
    %c0_i32_3 = arith.constant 0 : i32
    %12 = vector.broadcast %c0_i32_3 : i32 to vector<1x256xi32>
    %13 = arith.cmpi ne, %11, %12 : vector<1x256xi32>
    %c0_i32_4 = arith.constant 0 : i32
    %14 = vector.broadcast %c0_i32_4 : i32 to vector<1x256xi32>
    %15 = arith.cmpi slt, %11, %14 : vector<1x256xi32>
    %c0_i32_5 = arith.constant 0 : i32
    %16 = arith.cmpi slt, %9, %c0_i32_5 : i32
    %17 = vector.broadcast %16 : i1 to vector<1x256xi1>
    %18 = vector.broadcast %17 : vector<1x256xi1> to vector<1x256xi1>
    %19 = arith.xori %15, %18 : vector<1x256xi1>
    %20 = arith.andi %19, %13 : vector<1x256xi1>
    %21 = vector.broadcast %9 : i32 to vector<1x256xi32>
    %22 = arith.addi %11, %21 : vector<1x256xi32>
    %23 = arith.select %20, %22, %11 : vector<1x256xi1>, vector<1x256xi32>
    %c1_i32_6 = arith.constant 1 : i32
    %24 = vector.broadcast %c1_i32_6 : i32 to vector<1x256xi32>
    %25 = arith.cmpi sge, %23, %24 : vector<1x256xi32>
    %cst = arith.constant 1.000000e+00 : f32
    %cst_7 = arith.constant 0.000000e+00 : f32
    %26 = vector.broadcast %cst : f32 to vector<1x256xf32>
    %27 = vector.broadcast %cst_7 : f32 to vector<1x256xf32>
    %28 = arith.select %25, %26, %27 : vector<1x256xi1>, vector<1x256xf32>
    %c14_i32 = arith.constant 14 : i32
    %29 = vector.broadcast %c14_i32 : i32 to vector<1x256xi32>
    %30 = arith.cmpi sle, %23, %29 : vector<1x256xi32>
    %cst_8 = arith.constant 1.000000e+00 : f32
    %cst_9 = arith.constant 0.000000e+00 : f32
    %31 = vector.broadcast %cst_8 : f32 to vector<1x256xf32>
    %32 = vector.broadcast %cst_9 : f32 to vector<1x256xf32>
    %33 = arith.select %30, %31, %32 : vector<1x256xi1>, vector<1x256xf32>
    %34 = vector.broadcast %0 : f32 to vector<4x256xf32>
    %35 = arith.addf %6, %34 : vector<4x256xf32>
    %cst_10 = arith.constant 0.000000e+00 : f32
    %36 = vector.broadcast %cst_10 : f32 to vector<4x128xf32>
    %37 = tpu.concatenate %36, %35, %36 in 1 : vector<4x128xf32>, vector<4x256xf32>, vector<4x128xf32> -> vector<4x512xf32>
    %38 = vector.extract_strided_slice %37 {offsets = [0, 111], sizes = [4, 256], strides = [1, 1]} : vector<4x512xf32> to vector<4x256xf32>
    %39 = vector.broadcast %28 : vector<1x256xf32> to vector<4x256xf32>
    %40 = arith.mulf %38, %39 : vector<4x256xf32>
    %c0_11 = arith.constant 0 : index
    %c0_12 = arith.constant 0 : index
    %c0_13 = arith.constant 0 : index
    %41 = vector.load %arg3[%c0_11, %c0_12, %c0_13] : memref<9x4x4xf32, #tpu.memory_space<vmem>>, vector<1x4x4xf32>
    %42 = vector.shape_cast %41 : vector<1x4x4xf32> to vector<4x4xf32>
    %cst_14 = arith.constant dense<0.000000e+00> : vector<4x256xf32>
    %43 = tpu.matmul %42, %40, %cst_14 {dimension_numbers = #tpu.dot_dimension_numbers<[1], [0], [0], [1], [0, 0, 1, 1], [], []>} : vector<4x4xf32>, vector<4x256xf32>, vector<4x256xf32> -> vector<4x256xf32>
    %44 = vector.extract_strided_slice %37 {offsets = [0, 112], sizes = [4, 256], strides = [1, 1]} : vector<4x512xf32> to vector<4x256xf32>
    %c1_15 = arith.constant 1 : index
    %c0_16 = arith.constant 0 : index
    %c0_17 = arith.constant 0 : index
    %45 = vector.load %arg3[%c1_15, %c0_16, %c0_17] : memref<9x4x4xf32, #tpu.memory_space<vmem>>, vector<1x4x4xf32>
    %46 = vector.shape_cast %45 : vector<1x4x4xf32> to vector<4x4xf32>
    %cst_18 = arith.constant dense<0.000000e+00> : vector<4x256xf32>
    %47 = tpu.matmul %46, %44, %cst_18 {dimension_numbers = #tpu.dot_dimension_numbers<[1], [0], [0], [1], [0, 0, 1, 1], [], []>} : vector<4x4xf32>, vector<4x256xf32>, vector<4x256xf32> -> vector<4x256xf32>
    %48 = arith.addf %43, %47 : vector<4x256xf32>
    %49 = vector.extract_strided_slice %37 {offsets = [0, 113], sizes = [4, 256], strides = [1, 1]} : vector<4x512xf32> to vector<4x256xf32>
    %50 = vector.broadcast %33 : vector<1x256xf32> to vector<4x256xf32>
    %51 = arith.mulf %49, %50 : vector<4x256xf32>
    %c2_19 = arith.constant 2 : index
    %c0_20 = arith.constant 0 : index
    %c0_21 = arith.constant 0 : index
    %52 = vector.load %arg3[%c2_19, %c0_20, %c0_21] : memref<9x4x4xf32, #tpu.memory_space<vmem>>, vector<1x4x4xf32>
    %53 = vector.shape_cast %52 : vector<1x4x4xf32> to vector<4x4xf32>
    %cst_22 = arith.constant dense<0.000000e+00> : vector<4x256xf32>
    %54 = tpu.matmul %53, %51, %cst_22 {dimension_numbers = #tpu.dot_dimension_numbers<[1], [0], [0], [1], [0, 0, 1, 1], [], []>} : vector<4x4xf32>, vector<4x256xf32>, vector<4x256xf32> -> vector<4x256xf32>
    %55 = arith.addf %48, %54 : vector<4x256xf32>
    %56 = vector.extract_strided_slice %37 {offsets = [0, 127], sizes = [4, 256], strides = [1, 1]} : vector<4x512xf32> to vector<4x256xf32>
    %57 = vector.broadcast %28 : vector<1x256xf32> to vector<4x256xf32>
    %58 = arith.mulf %56, %57 : vector<4x256xf32>
    %c3_23 = arith.constant 3 : index
    %c0_24 = arith.constant 0 : index
    %c0_25 = arith.constant 0 : index
    %59 = vector.load %arg3[%c3_23, %c0_24, %c0_25] : memref<9x4x4xf32, #tpu.memory_space<vmem>>, vector<1x4x4xf32>
    %60 = vector.shape_cast %59 : vector<1x4x4xf32> to vector<4x4xf32>
    %cst_26 = arith.constant dense<0.000000e+00> : vector<4x256xf32>
    %61 = tpu.matmul %60, %58, %cst_26 {dimension_numbers = #tpu.dot_dimension_numbers<[1], [0], [0], [1], [0, 0, 1, 1], [], []>} : vector<4x4xf32>, vector<4x256xf32>, vector<4x256xf32> -> vector<4x256xf32>
    %62 = arith.addf %55, %61 : vector<4x256xf32>
    %63 = vector.extract_strided_slice %37 {offsets = [0, 128], sizes = [4, 256], strides = [1, 1]} : vector<4x512xf32> to vector<4x256xf32>
    %c4_27 = arith.constant 4 : index
    %c0_28 = arith.constant 0 : index
    %c0_29 = arith.constant 0 : index
    %64 = vector.load %arg3[%c4_27, %c0_28, %c0_29] : memref<9x4x4xf32, #tpu.memory_space<vmem>>, vector<1x4x4xf32>
    %65 = vector.shape_cast %64 : vector<1x4x4xf32> to vector<4x4xf32>
    %cst_30 = arith.constant dense<0.000000e+00> : vector<4x256xf32>
    %66 = tpu.matmul %65, %63, %cst_30 {dimension_numbers = #tpu.dot_dimension_numbers<[1], [0], [0], [1], [0, 0, 1, 1], [], []>} : vector<4x4xf32>, vector<4x256xf32>, vector<4x256xf32> -> vector<4x256xf32>
    %67 = arith.addf %62, %66 : vector<4x256xf32>
    %68 = vector.extract_strided_slice %37 {offsets = [0, 129], sizes = [4, 256], strides = [1, 1]} : vector<4x512xf32> to vector<4x256xf32>
    %69 = vector.broadcast %33 : vector<1x256xf32> to vector<4x256xf32>
    %70 = arith.mulf %68, %69 : vector<4x256xf32>
    %c5 = arith.constant 5 : index
    %c0_31 = arith.constant 0 : index
    %c0_32 = arith.constant 0 : index
    %71 = vector.load %arg3[%c5, %c0_31, %c0_32] : memref<9x4x4xf32, #tpu.memory_space<vmem>>, vector<1x4x4xf32>
    %72 = vector.shape_cast %71 : vector<1x4x4xf32> to vector<4x4xf32>
    %cst_33 = arith.constant dense<0.000000e+00> : vector<4x256xf32>
    %73 = tpu.matmul %72, %70, %cst_33 {dimension_numbers = #tpu.dot_dimension_numbers<[1], [0], [0], [1], [0, 0, 1, 1], [], []>} : vector<4x4xf32>, vector<4x256xf32>, vector<4x256xf32> -> vector<4x256xf32>
    %74 = arith.addf %67, %73 : vector<4x256xf32>
    %75 = vector.extract_strided_slice %37 {offsets = [0, 143], sizes = [4, 256], strides = [1, 1]} : vector<4x512xf32> to vector<4x256xf32>
    %76 = vector.broadcast %28 : vector<1x256xf32> to vector<4x256xf32>
    %77 = arith.mulf %75, %76 : vector<4x256xf32>
    %c6 = arith.constant 6 : index
    %c0_34 = arith.constant 0 : index
    %c0_35 = arith.constant 0 : index
    %78 = vector.load %arg3[%c6, %c0_34, %c0_35] : memref<9x4x4xf32, #tpu.memory_space<vmem>>, vector<1x4x4xf32>
    %79 = vector.shape_cast %78 : vector<1x4x4xf32> to vector<4x4xf32>
    %cst_36 = arith.constant dense<0.000000e+00> : vector<4x256xf32>
    %80 = tpu.matmul %79, %77, %cst_36 {dimension_numbers = #tpu.dot_dimension_numbers<[1], [0], [0], [1], [0, 0, 1, 1], [], []>} : vector<4x4xf32>, vector<4x256xf32>, vector<4x256xf32> -> vector<4x256xf32>
    %81 = arith.addf %74, %80 : vector<4x256xf32>
    %82 = vector.extract_strided_slice %37 {offsets = [0, 144], sizes = [4, 256], strides = [1, 1]} : vector<4x512xf32> to vector<4x256xf32>
    %c7 = arith.constant 7 : index
    %c0_37 = arith.constant 0 : index
    %c0_38 = arith.constant 0 : index
    %83 = vector.load %arg3[%c7, %c0_37, %c0_38] : memref<9x4x4xf32, #tpu.memory_space<vmem>>, vector<1x4x4xf32>
    %84 = vector.shape_cast %83 : vector<1x4x4xf32> to vector<4x4xf32>
    %cst_39 = arith.constant dense<0.000000e+00> : vector<4x256xf32>
    %85 = tpu.matmul %84, %82, %cst_39 {dimension_numbers = #tpu.dot_dimension_numbers<[1], [0], [0], [1], [0, 0, 1, 1], [], []>} : vector<4x4xf32>, vector<4x256xf32>, vector<4x256xf32> -> vector<4x256xf32>
    %86 = arith.addf %81, %85 : vector<4x256xf32>
    %87 = vector.extract_strided_slice %37 {offsets = [0, 145], sizes = [4, 256], strides = [1, 1]} : vector<4x512xf32> to vector<4x256xf32>
    %88 = vector.broadcast %33 : vector<1x256xf32> to vector<4x256xf32>
    %89 = arith.mulf %87, %88 : vector<4x256xf32>
    %c8 = arith.constant 8 : index
    %c0_40 = arith.constant 0 : index
    %c0_41 = arith.constant 0 : index
    %90 = vector.load %arg3[%c8, %c0_40, %c0_41] : memref<9x4x4xf32, #tpu.memory_space<vmem>>, vector<1x4x4xf32>
    %91 = vector.shape_cast %90 : vector<1x4x4xf32> to vector<4x4xf32>
    %cst_42 = arith.constant dense<0.000000e+00> : vector<4x256xf32>
    %92 = tpu.matmul %91, %89, %cst_42 {dimension_numbers = #tpu.dot_dimension_numbers<[1], [0], [0], [1], [0, 0, 1, 1], [], []>} : vector<4x4xf32>, vector<4x256xf32>, vector<4x256xf32> -> vector<4x256xf32>
    %93 = arith.addf %86, %92 : vector<4x256xf32>
    %94 = vector.broadcast %1 : f32 to vector<4x256xf32>
    %95 = arith.addf %93, %94 : vector<4x256xf32>
    %cst_43 = arith.constant 0.000000e+00 : f32
    %96 = vector.broadcast %cst_43 : f32 to vector<4x256xf32>
    %97 = arith.maximumf %95, %96 : vector<4x256xf32>
    %98 = vector.broadcast %2 : f32 to vector<4x256xf32>
    %99 = arith.addf %97, %98 : vector<4x256xf32>
    %cst_44 = arith.constant 0.000000e+00 : f32
    %100 = vector.broadcast %cst_44 : f32 to vector<4x128xf32>
    %101 = tpu.concatenate %100, %99, %100 in 1 : vector<4x128xf32>, vector<4x256xf32>, vector<4x128xf32> -> vector<4x512xf32>
    %102 = vector.extract_strided_slice %101 {offsets = [0, 111], sizes = [4, 256], strides = [1, 1]} : vector<4x512xf32> to vector<4x256xf32>
    %103 = vector.broadcast %28 : vector<1x256xf32> to vector<4x256xf32>
    %104 = arith.mulf %102, %103 : vector<4x256xf32>
    %c0_45 = arith.constant 0 : index
    %c0_46 = arith.constant 0 : index
    %c0_47 = arith.constant 0 : index
    %105 = vector.load %arg4[%c0_45, %c0_46, %c0_47] : memref<9x4x4xf32, #tpu.memory_space<vmem>>, vector<1x4x4xf32>
    %106 = vector.shape_cast %105 : vector<1x4x4xf32> to vector<4x4xf32>
    %cst_48 = arith.constant dense<0.000000e+00> : vector<4x256xf32>
    %107 = tpu.matmul %106, %104, %cst_48 {dimension_numbers = #tpu.dot_dimension_numbers<[1], [0], [0], [1], [0, 0, 1, 1], [], []>} : vector<4x4xf32>, vector<4x256xf32>, vector<4x256xf32> -> vector<4x256xf32>
    %108 = vector.extract_strided_slice %101 {offsets = [0, 112], sizes = [4, 256], strides = [1, 1]} : vector<4x512xf32> to vector<4x256xf32>
    %c1_49 = arith.constant 1 : index
    %c0_50 = arith.constant 0 : index
    %c0_51 = arith.constant 0 : index
    %109 = vector.load %arg4[%c1_49, %c0_50, %c0_51] : memref<9x4x4xf32, #tpu.memory_space<vmem>>, vector<1x4x4xf32>
    %110 = vector.shape_cast %109 : vector<1x4x4xf32> to vector<4x4xf32>
    %cst_52 = arith.constant dense<0.000000e+00> : vector<4x256xf32>
    %111 = tpu.matmul %110, %108, %cst_52 {dimension_numbers = #tpu.dot_dimension_numbers<[1], [0], [0], [1], [0, 0, 1, 1], [], []>} : vector<4x4xf32>, vector<4x256xf32>, vector<4x256xf32> -> vector<4x256xf32>
    %112 = arith.addf %107, %111 : vector<4x256xf32>
    %113 = vector.extract_strided_slice %101 {offsets = [0, 113], sizes = [4, 256], strides = [1, 1]} : vector<4x512xf32> to vector<4x256xf32>
    %114 = vector.broadcast %33 : vector<1x256xf32> to vector<4x256xf32>
    %115 = arith.mulf %113, %114 : vector<4x256xf32>
    %c2_53 = arith.constant 2 : index
    %c0_54 = arith.constant 0 : index
    %c0_55 = arith.constant 0 : index
    %116 = vector.load %arg4[%c2_53, %c0_54, %c0_55] : memref<9x4x4xf32, #tpu.memory_space<vmem>>, vector<1x4x4xf32>
    %117 = vector.shape_cast %116 : vector<1x4x4xf32> to vector<4x4xf32>
    %cst_56 = arith.constant dense<0.000000e+00> : vector<4x256xf32>
    %118 = tpu.matmul %117, %115, %cst_56 {dimension_numbers = #tpu.dot_dimension_numbers<[1], [0], [0], [1], [0, 0, 1, 1], [], []>} : vector<4x4xf32>, vector<4x256xf32>, vector<4x256xf32> -> vector<4x256xf32>
    %119 = arith.addf %112, %118 : vector<4x256xf32>
    %120 = vector.extract_strided_slice %101 {offsets = [0, 127], sizes = [4, 256], strides = [1, 1]} : vector<4x512xf32> to vector<4x256xf32>
    %121 = vector.broadcast %28 : vector<1x256xf32> to vector<4x256xf32>
    %122 = arith.mulf %120, %121 : vector<4x256xf32>
    %c3_57 = arith.constant 3 : index
    %c0_58 = arith.constant 0 : index
    %c0_59 = arith.constant 0 : index
    %123 = vector.load %arg4[%c3_57, %c0_58, %c0_59] : memref<9x4x4xf32, #tpu.memory_space<vmem>>, vector<1x4x4xf32>
    %124 = vector.shape_cast %123 : vector<1x4x4xf32> to vector<4x4xf32>
    %cst_60 = arith.constant dense<0.000000e+00> : vector<4x256xf32>
    %125 = tpu.matmul %124, %122, %cst_60 {dimension_numbers = #tpu.dot_dimension_numbers<[1], [0], [0], [1], [0, 0, 1, 1], [], []>} : vector<4x4xf32>, vector<4x256xf32>, vector<4x256xf32> -> vector<4x256xf32>
    %126 = arith.addf %119, %125 : vector<4x256xf32>
    %127 = vector.extract_strided_slice %101 {offsets = [0, 128], sizes = [4, 256], strides = [1, 1]} : vector<4x512xf32> to vector<4x256xf32>
    %c4_61 = arith.constant 4 : index
    %c0_62 = arith.constant 0 : index
    %c0_63 = arith.constant 0 : index
    %128 = vector.load %arg4[%c4_61, %c0_62, %c0_63] : memref<9x4x4xf32, #tpu.memory_space<vmem>>, vector<1x4x4xf32>
    %129 = vector.shape_cast %128 : vector<1x4x4xf32> to vector<4x4xf32>
    %cst_64 = arith.constant dense<0.000000e+00> : vector<4x256xf32>
    %130 = tpu.matmul %129, %127, %cst_64 {dimension_numbers = #tpu.dot_dimension_numbers<[1], [0], [0], [1], [0, 0, 1, 1], [], []>} : vector<4x4xf32>, vector<4x256xf32>, vector<4x256xf32> -> vector<4x256xf32>
    %131 = arith.addf %126, %130 : vector<4x256xf32>
    %132 = vector.extract_strided_slice %101 {offsets = [0, 129], sizes = [4, 256], strides = [1, 1]} : vector<4x512xf32> to vector<4x256xf32>
    %133 = vector.broadcast %33 : vector<1x256xf32> to vector<4x256xf32>
    %134 = arith.mulf %132, %133 : vector<4x256xf32>
    %c5_65 = arith.constant 5 : index
    %c0_66 = arith.constant 0 : index
    %c0_67 = arith.constant 0 : index
    %135 = vector.load %arg4[%c5_65, %c0_66, %c0_67] : memref<9x4x4xf32, #tpu.memory_space<vmem>>, vector<1x4x4xf32>
    %136 = vector.shape_cast %135 : vector<1x4x4xf32> to vector<4x4xf32>
    %cst_68 = arith.constant dense<0.000000e+00> : vector<4x256xf32>
    %137 = tpu.matmul %136, %134, %cst_68 {dimension_numbers = #tpu.dot_dimension_numbers<[1], [0], [0], [1], [0, 0, 1, 1], [], []>} : vector<4x4xf32>, vector<4x256xf32>, vector<4x256xf32> -> vector<4x256xf32>
    %138 = arith.addf %131, %137 : vector<4x256xf32>
    %139 = vector.extract_strided_slice %101 {offsets = [0, 143], sizes = [4, 256], strides = [1, 1]} : vector<4x512xf32> to vector<4x256xf32>
    %140 = vector.broadcast %28 : vector<1x256xf32> to vector<4x256xf32>
    %141 = arith.mulf %139, %140 : vector<4x256xf32>
    %c6_69 = arith.constant 6 : index
    %c0_70 = arith.constant 0 : index
    %c0_71 = arith.constant 0 : index
    %142 = vector.load %arg4[%c6_69, %c0_70, %c0_71] : memref<9x4x4xf32, #tpu.memory_space<vmem>>, vector<1x4x4xf32>
    %143 = vector.shape_cast %142 : vector<1x4x4xf32> to vector<4x4xf32>
    %cst_72 = arith.constant dense<0.000000e+00> : vector<4x256xf32>
    %144 = tpu.matmul %143, %141, %cst_72 {dimension_numbers = #tpu.dot_dimension_numbers<[1], [0], [0], [1], [0, 0, 1, 1], [], []>} : vector<4x4xf32>, vector<4x256xf32>, vector<4x256xf32> -> vector<4x256xf32>
    %145 = arith.addf %138, %144 : vector<4x256xf32>
    %146 = vector.extract_strided_slice %101 {offsets = [0, 144], sizes = [4, 256], strides = [1, 1]} : vector<4x512xf32> to vector<4x256xf32>
    %c7_73 = arith.constant 7 : index
    %c0_74 = arith.constant 0 : index
    %c0_75 = arith.constant 0 : index
    %147 = vector.load %arg4[%c7_73, %c0_74, %c0_75] : memref<9x4x4xf32, #tpu.memory_space<vmem>>, vector<1x4x4xf32>
    %148 = vector.shape_cast %147 : vector<1x4x4xf32> to vector<4x4xf32>
    %cst_76 = arith.constant dense<0.000000e+00> : vector<4x256xf32>
    %149 = tpu.matmul %148, %146, %cst_76 {dimension_numbers = #tpu.dot_dimension_numbers<[1], [0], [0], [1], [0, 0, 1, 1], [], []>} : vector<4x4xf32>, vector<4x256xf32>, vector<4x256xf32> -> vector<4x256xf32>
    %150 = arith.addf %145, %149 : vector<4x256xf32>
    %151 = vector.extract_strided_slice %101 {offsets = [0, 145], sizes = [4, 256], strides = [1, 1]} : vector<4x512xf32> to vector<4x256xf32>
    %152 = vector.broadcast %33 : vector<1x256xf32> to vector<4x256xf32>
    %153 = arith.mulf %151, %152 : vector<4x256xf32>
    %c8_77 = arith.constant 8 : index
    %c0_78 = arith.constant 0 : index
    %c0_79 = arith.constant 0 : index
    %154 = vector.load %arg4[%c8_77, %c0_78, %c0_79] : memref<9x4x4xf32, #tpu.memory_space<vmem>>, vector<1x4x4xf32>
    %155 = vector.shape_cast %154 : vector<1x4x4xf32> to vector<4x4xf32>
    %cst_80 = arith.constant dense<0.000000e+00> : vector<4x256xf32>
    %156 = tpu.matmul %155, %153, %cst_80 {dimension_numbers = #tpu.dot_dimension_numbers<[1], [0], [0], [1], [0, 0, 1, 1], [], []>} : vector<4x4xf32>, vector<4x256xf32>, vector<4x256xf32> -> vector<4x256xf32>
    %157 = arith.addf %150, %156 : vector<4x256xf32>
    %158 = vector.broadcast %4 : f32 to vector<4x256xf32>
    %159 = arith.mulf %157, %158 : vector<4x256xf32>
    %160 = vector.broadcast %3 : f32 to vector<4x256xf32>
    %161 = arith.addf %159, %160 : vector<4x256xf32>
    %162 = arith.addf %161, %6 : vector<4x256xf32>
    %cst_81 = arith.constant 0.000000e+00 : f32
    %163 = vector.broadcast %cst_81 : f32 to vector<4x256xf32>
    %164 = arith.maximumf %162, %163 : vector<4x256xf32>
    %c0_82 = arith.constant 0 : index
    %c0_83 = arith.constant 0 : index
    %c0_84 = arith.constant 0 : index
    %165 = vector.load %arg5[%c0_82, %c0_83, %c0_84] : memref<1x4x256xf32, #tpu.memory_space<vmem>>, vector<1x4x256xf32>
    %166 = vector.shape_cast %165 : vector<1x4x256xf32> to vector<4x256xf32>
    %167 = vector.shape_cast %164 : vector<4x256xf32> to vector<1x4x256xf32>
    tpu.vector_store %arg5[%c0_82, %c0_83, %c0_84], %167 {strides = array<i32>} : memref<1x4x256xf32, #tpu.memory_space<vmem>>, vector<1x4x256xf32>,
    return
  }
  func.func @transform_0(%arg0: i32) -> i32 {
    %c0_i32 = arith.constant 0 : i32
    %c0_i32_0 = arith.constant 0 : i32
    return %c0_i32 : i32
  }
  func.func @transform_1(%arg0: i32) -> (i32, i32, i32) {
    %c0_i32 = arith.constant 0 : i32
    %c0_i32_0 = arith.constant 0 : i32
    %c0_i32_1 = arith.constant 0 : i32
    return %arg0, %c0_i32, %c0_i32_0 : i32, i32, i32
  }
  func.func @transform_2(%arg0: i32) -> (i32, i32, i32) {
    %c0_i32 = arith.constant 0 : i32
    %c0_i32_0 = arith.constant 0 : i32
    %c0_i32_1 = arith.constant 0 : i32
    %c0_i32_2 = arith.constant 0 : i32
    return %c0_i32, %c0_i32_0, %c0_i32_1 : i32, i32, i32
  }
  func.func @transform_3(%arg0: i32) -> (i32, i32, i32) {
    %c0_i32 = arith.constant 0 : i32
    %c0_i32_0 = arith.constant 0 : i32
    %c0_i32_1 = arith.constant 0 : i32
    %c0_i32_2 = arith.constant 0 : i32
    return %c0_i32, %c0_i32_0, %c0_i32_1 : i32, i32, i32
  }
  func.func @transform_4(%arg0: i32) -> (i32, i32, i32) {
    %c0_i32 = arith.constant 0 : i32
    %c0_i32_0 = arith.constant 0 : i32
    %c0_i32_1 = arith.constant 0 : i32
    return %arg0, %c0_i32, %c0_i32_0 : i32, i32, i32
  }
}

</mosaic_0001>

<llo_original>
// kernel: tpu_custom_call.1
$region0: #{tpu_custom_call.1}
  #allocation0 [shape = 'u32[]', space=smem, size = 0x4, offset = 0x4, fixed_abs, tag = 'smem constant byte address 0x4 - core index']
  #allocation1 [shape = 'u32[144,128]{1,0:T(1,128)}', space=vmem, size = 0x12000, scoped, tag = 'internal scratch']
  %s0 = inlined_call_operand.vmem [shape: f32[5], index: 0, kind: input, shape index: {}]
  %s1 = inlined_call_operand.vmem [shape: f32[2,4,256], index: 1, kind: input, shape index: {}]
  %s2 = inlined_call_operand.vmem [shape: f32[9,4,4], index: 2, kind: input, shape index: {}]
  %s3 = inlined_call_operand.vmem [shape: f32[9,4,4], index: 3, kind: input, shape index: {}]
  %s4 = inlined_call_operand.hbm [shape: f32[2,4,256], index: 4, kind: output, shape index: {}]
  %s5 = sld [smem:[#allocation0]]
  $region53: #{tpu_custom_call.1} parent=0
    _
  %s7 = ssub.s32 1, %s5
  %s8 = scalar_select 0, %s7, %s5
  $region1: #{tpu_custom_call.1} parent=0
    #allocation2 [shape = 'u8[512]{0}', space=smem, size = 0x200, scoped, tag = 'input window, operand 0, single buffered']
    #allocation3 [shape = 's32[2]{0}', space=sflag, size = 0x8, scoped, tag = 'scoped memory for tpu_custom_call.1']
    #allocation4 [shape = 's32[2]{0}', space=sflag, size = 0x8, scoped, tag = 'scoped memory for tpu_custom_call.1']
    #allocation5 [shape = 'u8[8192]{0}', space=vmem, size = 0x2000, scoped, tag = 'output window, operand 0']
    %9 = vsyncpa [#allocation4], 0
    %10 = vsyncpa [#allocation3], 0
    %s11 = scalar_lea.sflag [#allocation3], 1
    %12 = vsyncpa %s11, 0
    loop: start=0, step=1, limit=4
    $region2: #{tpu_custom_call.1} parent=1 // loop_pre_header
      _
    $region3: #{tpu_custom_call.1} parent=1 // loop_header
      %s14 = sphi 0, %s18
      %p15 = scmp.ge.s32.totalorder %s14, 4
      %s22 = sphi 0, %s22
      %s24 = sphi 0, %s22
      %s25 = sphi 0, %s24
      %s39 = sphi 0, %s25
      %s45 = sphi 0, %s47
      %s48 = sphi 0, %s45
      %s49 = sphi 0, %s48
      %s65 = sphi 0, %s49
      %s69 = sphi 0, %s69
      %s71 = sphi 0, %s69
      %s72 = sphi 0, %s71
      %s86 = sphi 0, %s72
      %s90 = sphi 0, %s90
      %s92 = sphi 0, %s90
      %s93 = sphi 0, %s92
      %s107 = sphi 0, %s93
      %s113 = sphi 0, %s115
      %s116 = sphi 0, %s113
      %s117 = sphi 0, %s116
      %s133 = sphi 0, %s117
    $region4: #{tpu_custom_call.1} parent=1 // loop_header_branch
      %17 = sbr.rel (%p15) target = $region8
    $region5: #{tpu_custom_call.1} parent=1 // loop_body
      %s19 = ssub.s32 %s14, 1
      %s20 = ssub.s32 %s14, 2
      %s21 = sadd.s32 %s14, 1
      %s23 = sadd.s32 %s22, 1
      %p26 = scmp.eq.s32.totalorder %s14, 1
      %p27 = scmp.ne.s32.totalorder %s22, %s24
      %p28 = scmp.eq.s32.totalorder %s14, 0
      %p29 = por %p27, %p28
      %p30 = scmp.ne.s32.totalorder %s22, %s24
      %p31 = scmp.eq.s32.totalorder %s19, 1
      %p32 = por %p30, %p31
      %p33 = scmp.ne.s32.totalorder %s24, %s25
      %p34 = scmp.eq.s32.totalorder %s19, 0
      %p35 = por %p33, %p34
      %p36 = scmp.ne.s32.totalorder %s24, %s25
      %p37 = scmp.eq.s32.totalorder %s20, 1
      %p38 = por %p36, %p37
      %p40 = scmp.ne.s32.totalorder %s25, %s39
      %p41 = scmp.eq.s32.totalorder %s20, 0
      %p42 = por %p40, %p41
      %s43 = ssub.s32 %s14, %s21
      %p44 = scmp.eq.s32.totalorder %s43, 0
      %s46 = sadd.s32 %s45, 1
      %s47 = scalar_select %p44, %s45, %s46
      %p50 = pneg %p44
      %p51 = scmp.eq.s32.totalorder %s14, 1
      %p52 = por %p50, %p51
      %p53 = scmp.ne.s32.totalorder %s45, %s48
      %p54 = scmp.eq.s32.totalorder %s14, 0
      %p55 = por %p53, %p54
      %p56 = scmp.ne.s32.totalorder %s45, %s48
      %p57 = scmp.eq.s32.totalorder %s19, 1
      %p58 = por %p56, %p57
      %p59 = scmp.ne.s32.totalorder %s48, %s49
      %p60 = scmp.eq.s32.totalorder %s19, 0
      %p61 = por %p59, %p60
      %p62 = scmp.ne.s32.totalorder %s48, %s49
      %p63 = scmp.eq.s32.totalorder %s20, 1
      %p64 = por %p62, %p63
      %p66 = scmp.ne.s32.totalorder %s49, %s65
      %p67 = scmp.eq.s32.totalorder %s20, 0
      %p68 = por %p66, %p67
      %s70 = sadd.s32 %s69, 1
      %p73 = scmp.eq.s32.totalorder %s14, 1
      %p74 = scmp.ne.s32.totalorder %s69, %s71
      %p75 = scmp.eq.s32.totalorder %s14, 0
      %p76 = por %p74, %p75
      %p77 = scmp.ne.s32.totalorder %s69, %s71
      %p78 = scmp.eq.s32.totalorder %s19, 1
      %p79 = por %p77, %p78
      %p80 = scmp.ne.s32.totalorder %s71, %s72
      %p81 = scmp.eq.s32.totalorder %s19, 0
      %p82 = por %p80, %p81
      %p83 = scmp.ne.s32.totalorder %s71, %s72
      %p84 = scmp.eq.s32.totalorder %s20, 1
      %p85 = por %p83, %p84
      %p87 = scmp.ne.s32.totalorder %s72, %s86
      %p88 = scmp.eq.s32.totalorder %s20, 0
      %p89 = por %p87, %p88
      %s91 = sadd.s32 %s90, 1
      %p94 = scmp.eq.s32.totalorder %s14, 1
      %p95 = scmp.ne.s32.totalorder %s90, %s92
      %p96 = scmp.eq.s32.totalorder %s14, 0
      %p97 = por %p95, %p96
      %p98 = scmp.ne.s32.totalorder %s90, %s92
      %p99 = scmp.eq.s32.totalorder %s19, 1
      %p100 = por %p98, %p99
      %p101 = scmp.ne.s32.totalorder %s92, %s93
      %p102 = scmp.eq.s32.totalorder %s19, 0
      %p103 = por %p101, %p102
      %p104 = scmp.ne.s32.totalorder %s92, %s93
      %p105 = scmp.eq.s32.totalorder %s20, 1
      %p106 = por %p104, %p105
      %p108 = scmp.ne.s32.totalorder %s93, %s107
      %p109 = scmp.eq.s32.totalorder %s20, 0
      %p110 = por %p108, %p109
      %s111 = ssub.s32 %s14, %s21
      %p112 = scmp.eq.s32.totalorder %s111, 0
      %s114 = sadd.s32 %s113, 1
      %s115 = scalar_select %p112, %s113, %s114
      %p118 = pneg %p112
      %p119 = scmp.eq.s32.totalorder %s14, 1
      %p120 = por %p118, %p119
      %p121 = scmp.ne.s32.totalorder %s113, %s116
      %p122 = scmp.eq.s32.totalorder %s14, 0
      %p123 = por %p121, %p122
      %p124 = scmp.ne.s32.totalorder %s113, %s116
      %p125 = scmp.eq.s32.totalorder %s19, 1
      %p126 = por %p124, %p125
      %p127 = scmp.ne.s32.totalorder %s116, %s117
      %p128 = scmp.eq.s32.totalorder %s19, 0
      %p129 = por %p127, %p128
      %p130 = scmp.ne.s32.totalorder %s116, %s117
      %p131 = scmp.eq.s32.totalorder %s20, 1
      %p132 = por %p130, %p131
      %p134 = scmp.ne.s32.totalorder %s117, %s133
      %p135 = scmp.eq.s32.totalorder %s20, 0
      %p136 = por %p134, %p135
      %p137 = scmp.le.s32.totalorder 1, %s14
      %p138 = scmp.lt.s32.totalorder %s14, 3
      %p139 = pnand %p137, %p138
      %p140 = pneg %p139
      // Predicated region
      $region9: #{tpu_custom_call.1} parent=5 // pred_check
        _
      $region10: #{tpu_custom_call.1} parent=5 // pred_check_branch
        %142 = sbr.rel (%p139) target = $region12
      $region11: #{tpu_custom_call.1} parent=5 // pred_region
        %s143 = ssub.s32 %s14, 1
        // Predicated region
        $region13: #{tpu_custom_call.1} parent=11 // pred_check
          %p144 = pneg %p35
        $region14: #{tpu_custom_call.1} parent=11 // pred_check_branch
          %146 = sbr.rel (%p144) target = $region16
        $region15: #{tpu_custom_call.1} parent=11 // pred_region
          %s148 = ssub.s32 16, 16
          %149 = vsyncadd [#allocation4], %s148
          %s151 = sshll.u32 %s0, 4
          %s152 = int_to_ptr.vmem [resolvable:$true] %s151
          %154 = dma.vmem_to_smem %s152, 16, [#allocation2], [#allocation4]
        $region16: #{tpu_custom_call.1} parent=11 // pred_fallthru
          _
        // Predicated region
        $region17: #{tpu_custom_call.1} parent=11 // pred_check
          %p155 = pneg %p82
        $region18: #{tpu_custom_call.1} parent=11 // pred_check_branch
          %157 = sbr.rel (%p155) target = $region20
        $region19: #{tpu_custom_call.1} parent=11 // pred_region
          _
        $region20: #{tpu_custom_call.1} parent=11 // pred_fallthru
          _
        // Predicated region
        $region21: #{tpu_custom_call.1} parent=11 // pred_check
          %p158 = pneg %p103
        $region22: #{tpu_custom_call.1} parent=11 // pred_check_branch
          %160 = sbr.rel (%p158) target = $region24
        $region23: #{tpu_custom_call.1} parent=11 // pred_region
          _
        $region24: #{tpu_custom_call.1} parent=11 // pred_fallthru
          _
      $region12: #{tpu_custom_call.1} parent=5 // pred_fallthru
        _
      %p161 = scmp.lt.s32.totalorder %s14, 2
      // Predicated region
      $region25: #{tpu_custom_call.1} parent=5 // pred_check
        %p162 = pneg %p161
      $region26: #{tpu_custom_call.1} parent=5 // pred_check_branch
        %164 = sbr.rel (%p162) target = $region28
      $region27: #{tpu_custom_call.1} parent=5 // pred_region
        // Predicated region
        $region29: #{tpu_custom_call.1} parent=27 // pred_check
          %p165 = pneg %p55
        $region30: #{tpu_custom_call.1} parent=27 // pred_check_branch
          %167 = sbr.rel (%p165) target = $region32
        $region31: #{tpu_custom_call.1} parent=27 // pred_region
          %p168 = scmp.lt.s32.totalorder %s14, 1
          %s169 = scalar_select %p168, %s14, 1
          %s170 = smul.addr %s169, 2
          %s171 = smul.addr %s170, 4
          %s172 = scalar_lea.vmem %s1, %s171
        $region32: #{tpu_custom_call.1} parent=27 // pred_fallthru
          _
      $region28: #{tpu_custom_call.1} parent=5 // pred_fallthru
        _
      %p173 = scmp.le.s32.totalorder 1, %s14
      %p174 = scmp.lt.s32.totalorder %s14, 3
      %p175 = pnand %p173, %p174
      %p176 = pneg %p175
      // Predicated region
      $region33: #{tpu_custom_call.1} parent=5 // pred_check
        _
      $region34: #{tpu_custom_call.1} parent=5 // pred_check_branch
        %178 = sbr.rel (%p175) target = $region36
      $region35: #{tpu_custom_call.1} parent=5 // pred_region
        %s179 = ssub.s32 %s14, 1
        // Predicated region
        $region37: #{tpu_custom_call.1} parent=35 // pred_check
          %p180 = pneg %p35
        $region38: #{tpu_custom_call.1} parent=35 // pred_check_branch
          %182 = sbr.rel (%p180) target = $region40
        $region39: #{tpu_custom_call.1} parent=35 // pred_region
          %183 = dma.done [#allocation4], 16
        $region40: #{tpu_custom_call.1} parent=35 // pred_fallthru
          _
        %184 = sfence
        %p185 = pneg %p35
        %p186 = pneg %p32
        %p187 = scmp.lt.s32.totalorder %s19, 1
        %s188 = scalar_select %p187, %s19, 1
        %s189 = smul.addr %s188, 2
        %s190 = smul.addr %s189, 4
        %s191 = scalar_lea.vmem %s1, %s190
        %p192 = pneg %p61
        %p193 = pneg %p58
        %p194 = pneg %p82
        %p195 = pneg %p79
        %p196 = pneg %p103
        %p197 = pneg %p100
        %p198 = pneg %p129
        %p199 = pneg %p126
        %s200 = sand.u32 %s116, 1
        %s201 = scalar_lea.sflag [#allocation3], %s200
        %s202 = sand.u32 %s116, 1
        %s203 = smul.addr %s202, 8
        %s204 = scalar_lea.vmem [#allocation5], %s203
        %p205 = scmp.lt.s32.totalorder %s19, 1
        %s206 = scalar_select %p205, %s19, 1
        %s207 = smul.addr %s206, 2
        %s208 = smul.addr %s207, 4
        %s209 = scalar_lea.vmem %s1, %s208
        %s210 = sld [smem:[#allocation2]]
        %s211 = sld [smem:[#allocation2 + $0x1]]
        %s212 = sld [smem:[#allocation2 + $0x2]]
        %s213 = sld [smem:[#allocation2 + $0x3]]
        %s214 = sld [smem:[#allocation2 + $0x4]]
        %v215 = vld [vmem:[%s209] sm:$0xff]
        %v216 = vlaneseq
        %v217 = vand.u32 %v216, 127
        %v218 = vadd.s32 %v217, 128
        %vm219 = vcmp.lt.s32.totalorder %v217, 0
        %v220 = vsub.s32 0, %v217
        %v221 = vsel %vm219, %v220, %v217
        %v222 = vshrl.u32 %v221, 4
        %v223 = vand.u32 %v221, 15
        %v224 = vsub.s32 0, %v223
        %v225 = vsel %vm219, %v224, %v223
        %vm226 = vcmp.lt.s32.totalorder %v218, 0
        %v227 = vsub.s32 0, %v218
        %v228 = vsel %vm226, %v227, %v218
        %v229 = vshrl.u32 %v228, 4
        %v230 = vand.u32 %v228, 15
        %v231 = vsub.s32 0, %v230
        %v232 = vsel %vm226, %v231, %v230
        %vm233 = vcmp.ne.s32.totalorder %v225, 0
        %vm234 = vcmp.ne.s32.totalorder %v232, 0
        %vm235 = vcmp.lt.s32.totalorder %v225, 0
        %vm236 = vcmp.lt.s32.totalorder %v232, 0
        %vm237 = vmand %vm235, %vm233
        %vm238 = vmand %vm236, %vm234
        %v239 = vadd.s32 %v225, 16
        %v240 = vadd.s32 %v232, 16
        %v241 = vsel %vm237, %v239, %v225
        %v242 = vsel %vm238, %v240, %v232
        %vm243 = vcmp.ge.s32.totalorder %v241, 1
        %vm244 = vcmp.ge.s32.totalorder %v242, 1
        %v245 = vsel %vm243, 1.0, 0.0
        %v246 = vsel %vm244, 1.0, 0.0
        %vm247 = vcmp.le.s32.totalorder %v241, 14
        %vm248 = vcmp.le.s32.totalorder %v242, 14
        %v249 = vsel %vm247, 1.0, 0.0
        %v250 = vsel %vm248, 1.0, 0.0
        %v251 = vstv %s210
        %v252 = vadd.f32 %v215, %v251
        %v254 = vcombine.high %v252, %v252
        %258 = vrot.lane.b32.xlu0 %v245, 111
        %v259 = vpop.permute.xlu0 %258
        %260 = vrot.lane.b32.xlu0 %v246, 111
        %v261 = vpop.permute.xlu0 %260
        %vm262 = vcmask 908288
        %v263 = vsel %vm262, %v259, %v261
        %v267 = vmul.f32 %v259, 0.0
        %v268 = vmul.f32 %v252, %v263
        %v269 = vmul.f32 %v254, %v261
        %v270 = vld [vmem:[%s2] sm:$0xf]
        %s271 = scalar_lea.vmem %s2, 4
        %v272 = vld [vmem:[%s271] sm:$0xf]
        %274 = vrot.lane.b32.xlu0 0.0, 16
        %v275 = vpop.permute.xlu0 %274
        %276 = vrot.lane.b32.xlu0 %v252, 16
        %v277 = vpop.permute.xlu0 %276
        %278 = vrot.lane.b32.xlu0 %v254, 16
        %v279 = vpop.permute.xlu0 %278
        %vm280 = vcmask 130048
        %v281 = vsel %vm280, %v275, %v277
        %v282 = vsel %vm280, %v277, %v279
        %vm283 = vcmask 31744
        %v285 = vsel %vm283, %v272, 0
        %vm287 = vcmask 1043456
        %v288 = vsel %vm287, %v281, 0
        %v290 = vsel %vm287, %v282, 0
        %292 = vmatprep.subr.mxu0 %v290
        %293 = vmatpush1.msra.mxu0 %v288
        %294 = vmatprep.subr.mxu0 0.0
        %295 = vmatpush1.msra.mxu0 0.0
        %296 = vmatprep.subr.mxu0 0.0
        %297 = vmatpush1.msra.mxu0 0.0
        %298 = vmatprep.subr.mxu0 0.0
        %299 = vmatpush1.msra.mxu0 0.0
        %300 = vmatprep.subr.mxu0 0.0
        %301 = vmatpush1.msra.mxu0 0.0
        %302 = vmatprep.subr.mxu0 0.0
        %303 = vmatpush1.msra.mxu0 0.0
        %304 = vmatprep.subr.mxu0 0.0
        %305 = vmatpush1.msra.mxu0 0.0
        %306 = vmatprep.subr.mxu0 0.0
        %307 = vmatpush1.msra.mxu0 0.0
        %308 = vmatprep.subr.mxu0 0.0
        %309 = vmatpush1.msra.mxu0 0.0
        %310 = vmatprep.subr.mxu0 0.0
        %311 = vmatpush1.msra.mxu0 0.0
        %312 = vmatprep.subr.mxu0 0.0
        %313 = vmatpush1.msra.mxu0 0.0
        %314 = vmatprep.subr.mxu0 0.0
        %315 = vmatpush1.msra.mxu0 0.0
        %316 = vmatprep.subr.mxu0 0.0
        %317 = vmatpush1.msra.mxu0 0.0
        %318 = vmatprep.subr.mxu0 0.0
        %319 = vmatpush1.msra.mxu0 0.0
        %320 = vmatprep.subr.mxu0 0.0
        %321 = vmatpush1.msra.mxu0 0.0
        %322 = vmatprep.subr.mxu0 0.0
        %323 = vmatpush1.msra.mxu0 0.0
        %324 = vmatprep.subr.mxu0 0.0
        %325 = vmatpush1.msra.mxu0 0.0
        %326 = vmatprep.subr.mxu0 0.0
        %327 = vmatpush1.msra.mxu0 0.0
        %328 = vmatprep.subr.mxu0 0.0
        %329 = vmatpush1.msra.mxu0 0.0
        %330 = vmatprep.subr.mxu0 0.0
        %331 = vmatpush1.msra.mxu0 0.0
        %332 = vmatprep.subr.mxu0 0.0
        %333 = vmatpush1.msra.mxu0 0.0
        %334 = vmatprep.subr.mxu0 0.0
        %335 = vmatpush1.msra.mxu0 0.0
        %336 = vmatprep.subr.mxu0 0.0
        %337 = vmatpush1.msra.mxu0 0.0
        %338 = vmatprep.subr.mxu0 0.0
        %339 = vmatpush1.msra.mxu0 0.0
        %340 = vmatprep.subr.mxu0 0.0
        %341 = vmatpush1.msra.mxu0 0.0
        %342 = vmatprep.subr.mxu0 0.0
        %343 = vmatpush1.msra.mxu0 0.0
        %344 = vmatprep.subr.mxu0 0.0
        %345 = vmatpush1.msra.mxu0 0.0
        %346 = vmatprep.subr.mxu0 0.0
        %347 = vmatpush1.msra.mxu0 0.0
        %348 = vmatprep.subr.mxu0 0.0
        %349 = vmatpush1.msra.mxu0 0.0
        %350 = vmatprep.subr.mxu0 0.0
        %351 = vmatpush1.msra.mxu0 0.0
        %352 = vmatprep.subr.mxu0 0.0
        %353 = vmatpush1.msra.mxu0 0.0
        %354 = vmatprep.subr.mxu0 0.0
        %355 = vmatpush1.msra.mxu0 0.0
        %356 = vmatprep.mubr.f32.mxu0 0.0
        %357 = vmatmul.mubr.f32.gmra.mrb[0].mxu0 %v285
        %v358 = vpop.f32.mrb[0].mxu0
        %v359 = vadd.f32 0.0, %v358
        %v360 = vpop.f32.mrb[0].mxu0
        %v361 = vadd.f32 0.0, %v360
        %362 = vdwg.mxu0
        %366 = vrot.lane.b32.xlu0 %v267, 17
        %v367 = vpop.permute.xlu0 %366
        %368 = vrot.lane.b32.xlu0 %v268, 17
        %v369 = vpop.permute.xlu0 %368
        %370 = vrot.lane.b32.xlu0 %v269, 17
        %v371 = vpop.permute.xlu0 %370
        %vm372 = vcmask 138240
        %v373 = vsel %vm372, %v367, %v369
        %v374 = vsel %vm372, %v369, %v371
        %v376 = vsel %vm283, %v270, 0
        %v378 = vsel %vm287, %v373, 0
        %v380 = vsel %vm287, %v374, 0
        %382 = vmatprep.subr.mxu0 %v380
        %383 = vmatpush1.msra.mxu0 %v378
        %384 = vmatprep.subr.mxu0 0.0
        %385 = vmatpush1.msra.mxu0 0.0
        %386 = vmatprep.subr.mxu0 0.0
        %387 = vmatpush1.msra.mxu0 0.0
        %388 = vmatprep.subr.mxu0 0.0
        %389 = vmatpush1.msra.mxu0 0.0
        %390 = vmatprep.subr.mxu0 0.0
        %391 = vmatpush1.msra.mxu0 0.0
        %392 = vmatprep.subr.mxu0 0.0
        %393 = vmatpush1.msra.mxu0 0.0
        %394 = vmatprep.subr.mxu0 0.0
        %395 = vmatpush1.msra.mxu0 0.0
        %396 = vmatprep.subr.mxu0 0.0
        %397 = vmatpush1.msra.mxu0 0.0
        %398 = vmatprep.subr.mxu0 0.0
        %399 = vmatpush1.msra.mxu0 0.0
        %400 = vmatprep.subr.mxu0 0.0
        %401 = vmatpush1.msra.mxu0 0.0
        %402 = vmatprep.subr.mxu0 0.0
        %403 = vmatpush1.msra.mxu0 0.0
        %404 = vmatprep.subr.mxu0 0.0
        %405 = vmatpush1.msra.mxu0 0.0
        %406 = vmatprep.subr.mxu0 0.0
        %407 = vmatpush1.msra.mxu0 0.0
        %408 = vmatprep.subr.mxu0 0.0
        %409 = vmatpush1.msra.mxu0 0.0
        %410 = vmatprep.subr.mxu0 0.0
        %411 = vmatpush1.msra.mxu0 0.0
        %412 = vmatprep.subr.mxu0 0.0
        %413 = vmatpush1.msra.mxu0 0.0
        %414 = vmatprep.subr.mxu0 0.0
        %415 = vmatpush1.msra.mxu0 0.0
        %416 = vmatprep.subr.mxu0 0.0
        %417 = vmatpush1.msra.mxu0 0.0
        %418 = vmatprep.subr.mxu0 0.0
        %419 = vmatpush1.msra.mxu0 0.0
        %420 = vmatprep.subr.mxu0 0.0
        %421 = vmatpush1.msra.mxu0 0.0
        %422 = vmatprep.subr.mxu0 0.0
        %423 = vmatpush1.msra.mxu0 0.0
        %424 = vmatprep.subr.mxu0 0.0
        %425 = vmatpush1.msra.mxu0 0.0
        %426 = vmatprep.subr.mxu0 0.0
        %427 = vmatpush1.msra.mxu0 0.0
        %428 = vmatprep.subr.mxu0 0.0
        %429 = vmatpush1.msra.mxu0 0.0
        %430 = vmatprep.subr.mxu0 0.0
        %431 = vmatpush1.msra.mxu0 0.0
        %432 = vmatprep.subr.mxu0 0.0
        %433 = vmatpush1.msra.mxu0 0.0
        %434 = vmatprep.subr.mxu0 0.0
        %435 = vmatpush1.msra.mxu0 0.0
        %436 = vmatprep.subr.mxu0 0.0
        %437 = vmatpush1.msra.mxu0 0.0
        %438 = vmatprep.subr.mxu0 0.0
        %439 = vmatpush1.msra.mxu0 0.0
        %440 = vmatprep.subr.mxu0 0.0
        %441 = vmatpush1.msra.mxu0 0.0
        %442 = vmatprep.subr.mxu0 0.0
        %443 = vmatpush1.msra.mxu0 0.0
        %444 = vmatprep.subr.mxu0 0.0
        %445 = vmatpush1.msra.mxu0 0.0
        %446 = vmatprep.mubr.f32.mxu0 0.0
        %447 = vmatmul.mubr.f32.gmra.mrb[0].mxu0 %v376
        %v448 = vpop.f32.mrb[0].mxu0
        %v449 = vadd.f32 %v359, %v448
        %v450 = vpop.f32.mrb[0].mxu0
        %v451 = vadd.f32 %v361, %v450
        %452 = vdwg.mxu0
        %455 = vrot.lane.b32.xlu0 %v249, 113
        %v456 = vpop.permute.xlu0 %455
        %457 = vrot.lane.b32.xlu0 %v250, 113
        %v458 = vpop.permute.xlu0 %457
        %vm459 = vcmask 924672
        %v460 = vsel %vm459, %v456, %v458
        %v464 = vmul.f32 %v456, 0.0
        %v465 = vmul.f32 %v252, %v460
        %v466 = vmul.f32 %v254, %v458
        %s467 = scalar_lea.vmem %s2, 8
        %v468 = vld [vmem:[%s467] sm:$0xf]
        %472 = vrot.lane.b32.xlu0 %v464, 15
        %v473 = vpop.permute.xlu0 %472
        %474 = vrot.lane.b32.xlu0 %v465, 15
        %v475 = vpop.permute.xlu0 %474
        %476 = vrot.lane.b32.xlu0 %v466, 15
        %v477 = vpop.permute.xlu0 %476
        %vm478 = vcmask 121856
        %v479 = vsel %vm478, %v473, %v475
        %v480 = vsel %vm478, %v475, %v477
        %v482 = vsel %vm283, %v468, 0
        %v484 = vsel %vm287, %v479, 0
        %v486 = vsel %vm287, %v480, 0
        %488 = vmatprep.subr.mxu0 %v486
        %489 = vmatpush1.msra.mxu0 %v484
        %490 = vmatprep.subr.mxu0 0.0
        %491 = vmatpush1.msra.mxu0 0.0
        %492 = vmatprep.subr.mxu0 0.0
        %493 = vmatpush1.msra.mxu0 0.0
        %494 = vmatprep.subr.mxu0 0.0
        %495 = vmatpush1.msra.mxu0 0.0
        %496 = vmatprep.subr.mxu0 0.0
        %497 = vmatpush1.msra.mxu0 0.0
        %498 = vmatprep.subr.mxu0 0.0
        %499 = vmatpush1.msra.mxu0 0.0
        %500 = vmatprep.subr.mxu0 0.0
        %501 = vmatpush1.msra.mxu0 0.0
        %502 = vmatprep.subr.mxu0 0.0
        %503 = vmatpush1.msra.mxu0 0.0
        %504 = vmatprep.subr.mxu0 0.0
        %505 = vmatpush1.msra.mxu0 0.0
        %506 = vmatprep.subr.mxu0 0.0
        %507 = vmatpush1.msra.mxu0 0.0
        %508 = vmatprep.subr.mxu0 0.0
        %509 = vmatpush1.msra.mxu0 0.0
        %510 = vmatprep.subr.mxu0 0.0
        %511 = vmatpush1.msra.mxu0 0.0
        %512 = vmatprep.subr.mxu0 0.0
        %513 = vmatpush1.msra.mxu0 0.0
        %514 = vmatprep.subr.mxu0 0.0
        %515 = vmatpush1.msra.mxu0 0.0
        %516 = vmatprep.subr.mxu0 0.0
        %517 = vmatpush1.msra.mxu0 0.0
        %518 = vmatprep.subr.mxu0 0.0
        %519 = vmatpush1.msra.mxu0 0.0
        %520 = vmatprep.subr.mxu0 0.0
        %521 = vmatpush1.msra.mxu0 0.0
        %522 = vmatprep.subr.mxu0 0.0
        %523 = vmatpush1.msra.mxu0 0.0
        %524 = vmatprep.subr.mxu0 0.0
        %525 = vmatpush1.msra.mxu0 0.0
        %526 = vmatprep.subr.mxu0 0.0
        %527 = vmatpush1.msra.mxu0 0.0
        %528 = vmatprep.subr.mxu0 0.0
        %529 = vmatpush1.msra.mxu0 0.0
        %530 = vmatprep.subr.mxu0 0.0
        %531 = vmatpush1.msra.mxu0 0.0
        %532 = vmatprep.subr.mxu0 0.0
        %533 = vmatpush1.msra.mxu0 0.0
        %534 = vmatprep.subr.mxu0 0.0
        %535 = vmatpush1.msra.mxu0 0.0
        %536 = vmatprep.subr.mxu0 0.0
        %537 = vmatpush1.msra.mxu0 0.0
        %538 = vmatprep.subr.mxu0 0.0
        %539 = vmatpush1.msra.mxu0 0.0
        %540 = vmatprep.subr.mxu0 0.0
        %541 = vmatpush1.msra.mxu0 0.0
        %542 = vmatprep.subr.mxu0 0.0
        %543 = vmatpush1.msra.mxu0 0.0
        %544 = vmatprep.subr.mxu0 0.0
        %545 = vmatpush1.msra.mxu0 0.0
        %546 = vmatprep.subr.mxu0 0.0
        %547 = vmatpush1.msra.mxu0 0.0
        %548 = vmatprep.subr.mxu0 0.0
        %549 = vmatpush1.msra.mxu0 0.0
        %550 = vmatprep.subr.mxu0 0.0
        %551 = vmatpush1.msra.mxu0 0.0
        %552 = vmatprep.mubr.f32.mxu0 0.0
        %553 = vmatmul.mubr.f32.gmra.mrb[0].mxu0 %v482
        %v554 = vpop.f32.mrb[0].mxu0
        %v555 = vadd.f32 0.0, %v554
        %v556 = vpop.f32.mrb[0].mxu0
        %v557 = vadd.f32 0.0, %v556
        %558 = vdwg.mxu0
        %v559 = vadd.f32 %v449, %v555
        %v560 = vadd.f32 %v451, %v557
        %561 = vrot.lane.b32.xlu0 %v245, 127
        %v562 = vpop.permute.xlu0 %561
        %563 = vrot.lane.b32.xlu0 %v246, 127
        %v564 = vpop.permute.xlu0 %563
        %vm565 = vcmask 1039360
        %v566 = vsel %vm565, %v562, %v564
        %v570 = vmul.f32 %v562, 0.0
        %v571 = vmul.f32 %v252, %v566
        %v572 = vmul.f32 %v254, %v564
        %s573 = scalar_lea.vmem %s2, 12
        %v574 = vld [vmem:[%s573] sm:$0xf]
        %578 = vrot.lane.b32.xlu0 %v570, 1
        %v579 = vpop.permute.xlu0 %578
        %580 = vrot.lane.b32.xlu0 %v571, 1
        %v581 = vpop.permute.xlu0 %580
        %582 = vrot.lane.b32.xlu0 %v572, 1
        %v583 = vpop.permute.xlu0 %582
        %vm584 = vcmask 7168
        %v585 = vsel %vm584, %v579, %v581
        %v586 = vsel %vm584, %v581, %v583
        %v588 = vsel %vm283, %v574, 0
        %v590 = vsel %vm287, %v585, 0
        %v592 = vsel %vm287, %v586, 0
        %594 = vmatprep.subr.mxu0 %v592
        %595 = vmatpush1.msra.mxu0 %v590
        %596 = vmatprep.subr.mxu0 0.0
        %597 = vmatpush1.msra.mxu0 0.0
        %598 = vmatprep.subr.mxu0 0.0
        %599 = vmatpush1.msra.mxu0 0.0
        %600 = vmatprep.subr.mxu0 0.0
        %601 = vmatpush1.msra.mxu0 0.0
        %602 = vmatprep.subr.mxu0 0.0
        %603 = vmatpush1.msra.mxu0 0.0
        %604 = vmatprep.subr.mxu0 0.0
        %605 = vmatpush1.msra.mxu0 0.0
        %606 = vmatprep.subr.mxu0 0.0
        %607 = vmatpush1.msra.mxu0 0.0
        %608 = vmatprep.subr.mxu0 0.0
        %609 = vmatpush1.msra.mxu0 0.0
        %610 = vmatprep.subr.mxu0 0.0
        %611 = vmatpush1.msra.mxu0 0.0
        %612 = vmatprep.subr.mxu0 0.0
        %613 = vmatpush1.msra.mxu0 0.0
        %614 = vmatprep.subr.mxu0 0.0
        %615 = vmatpush1.msra.mxu0 0.0
        %616 = vmatprep.subr.mxu0 0.0
        %617 = vmatpush1.msra.mxu0 0.0
        %618 = vmatprep.subr.mxu0 0.0
        %619 = vmatpush1.msra.mxu0 0.0
        %620 = vmatprep.subr.mxu0 0.0
        %621 = vmatpush1.msra.mxu0 0.0
        %622 = vmatprep.subr.mxu0 0.0
        %623 = vmatpush1.msra.mxu0 0.0
        %624 = vmatprep.subr.mxu0 0.0
        %625 = vmatpush1.msra.mxu0 0.0
        %626 = vmatprep.subr.mxu0 0.0
        %627 = vmatpush1.msra.mxu0 0.0
        %628 = vmatprep.subr.mxu0 0.0
        %629 = vmatpush1.msra.mxu0 0.0
        %630 = vmatprep.subr.mxu0 0.0
        %631 = vmatpush1.msra.mxu0 0.0
        %632 = vmatprep.subr.mxu0 0.0
        %633 = vmatpush1.msra.mxu0 0.0
        %634 = vmatprep.subr.mxu0 0.0
        %635 = vmatpush1.msra.mxu0 0.0
        %636 = vmatprep.subr.mxu0 0.0
        %637 = vmatpush1.msra.mxu0 0.0
        %638 = vmatprep.subr.mxu0 0.0
        %639 = vmatpush1.msra.mxu0 0.0
        %640 = vmatprep.subr.mxu0 0.0
        %641 = vmatpush1.msra.mxu0 0.0
        %642 = vmatprep.subr.mxu0 0.0
        %643 = vmatpush1.msra.mxu0 0.0
        %644 = vmatprep.subr.mxu0 0.0
        %645 = vmatpush1.msra.mxu0 0.0
        %646 = vmatprep.subr.mxu0 0.0
        %647 = vmatpush1.msra.mxu0 0.0
        %648 = vmatprep.subr.mxu0 0.0
        %649 = vmatpush1.msra.mxu0 0.0
        %650 = vmatprep.subr.mxu0 0.0
        %651 = vmatpush1.msra.mxu0 0.0
        %652 = vmatprep.subr.mxu0 0.0
        %653 = vmatpush1.msra.mxu0 0.0
        %654 = vmatprep.subr.mxu0 0.0
        %655 = vmatpush1.msra.mxu0 0.0
        %656 = vmatprep.subr.mxu0 0.0
        %657 = vmatpush1.msra.mxu0 0.0
        %658 = vmatprep.mubr.f32.mxu0 0.0
        %659 = vmatmul.mubr.f32.gmra.mrb[0].mxu0 %v588
        %v660 = vpop.f32.mrb[0].mxu0
        %v661 = vadd.f32 0.0, %v660
        %v662 = vpop.f32.mrb[0].mxu0
        %v663 = vadd.f32 0.0, %v662
        %664 = vdwg.mxu0
        %v665 = vadd.f32 %v559, %v661
        %v666 = vadd.f32 %v560, %v663
        %s667 = scalar_lea.vmem %s2, 16
        %v668 = vld [vmem:[%s667] sm:$0xf]
        %v670 = vsel %vm283, %v668, 0
        %v672 = vsel %vm287, %v252, 0
        %v674 = vsel %vm287, %v254, 0
        %676 = vmatprep.subr.mxu0 %v674
        %677 = vmatpush1.msra.mxu0 %v672
        %678 = vmatprep.subr.mxu0 0.0
        %679 = vmatpush1.msra.mxu0 0.0
        %680 = vmatprep.subr.mxu0 0.0
        %681 = vmatpush1.msra.mxu0 0.0
        %682 = vmatprep.subr.mxu0 0.0
        %683 = vmatpush1.msra.mxu0 0.0
        %684 = vmatprep.subr.mxu0 0.0
        %685 = vmatpush1.msra.mxu0 0.0
        %686 = vmatprep.subr.mxu0 0.0
        %687 = vmatpush1.msra.mxu0 0.0
        %688 = vmatprep.subr.mxu0 0.0
        %689 = vmatpush1.msra.mxu0 0.0
        %690 = vmatprep.subr.mxu0 0.0
        %691 = vmatpush1.msra.mxu0 0.0
        %692 = vmatprep.subr.mxu0 0.0
        %693 = vmatpush1.msra.mxu0 0.0
        %694 = vmatprep.subr.mxu0 0.0
        %695 = vmatpush1.msra.mxu0 0.0
        %696 = vmatprep.subr.mxu0 0.0
        %697 = vmatpush1.msra.mxu0 0.0
        %698 = vmatprep.subr.mxu0 0.0
        %699 = vmatpush1.msra.mxu0 0.0
        %700 = vmatprep.subr.mxu0 0.0
        %701 = vmatpush1.msra.mxu0 0.0
        %702 = vmatprep.subr.mxu0 0.0
        %703 = vmatpush1.msra.mxu0 0.0
        %704 = vmatprep.subr.mxu0 0.0
        %705 = vmatpush1.msra.mxu0 0.0
        %706 = vmatprep.subr.mxu0 0.0
        %707 = vmatpush1.msra.mxu0 0.0
        %708 = vmatprep.subr.mxu0 0.0
        %709 = vmatpush1.msra.mxu0 0.0
        %710 = vmatprep.subr.mxu0 0.0
        %711 = vmatpush1.msra.mxu0 0.0
        %712 = vmatprep.subr.mxu0 0.0
        %713 = vmatpush1.msra.mxu0 0.0
        %714 = vmatprep.subr.mxu0 0.0
        %715 = vmatpush1.msra.mxu0 0.0
        %716 = vmatprep.subr.mxu0 0.0
        %717 = vmatpush1.msra.mxu0 0.0
        %718 = vmatprep.subr.mxu0 0.0
        %719 = vmatpush1.msra.mxu0 0.0
        %720 = vmatprep.subr.mxu0 0.0
        %721 = vmatpush1.msra.mxu0 0.0
        %722 = vmatprep.subr.mxu0 0.0
        %723 = vmatpush1.msra.mxu0 0.0
        %724 = vmatprep.subr.mxu0 0.0
        %725 = vmatpush1.msra.mxu0 0.0
        %726 = vmatprep.subr.mxu0 0.0
        %727 = vmatpush1.msra.mxu0 0.0
        %728 = vmatprep.subr.mxu0 0.0
        %729 = vmatpush1.msra.mxu0 0.0
        %730 = vmatprep.subr.mxu0 0.0
        %731 = vmatpush1.msra.mxu0 0.0
        %732 = vmatprep.subr.mxu0 0.0
        %733 = vmatpush1.msra.mxu0 0.0
        %734 = vmatprep.subr.mxu0 0.0
        %735 = vmatpush1.msra.mxu0 0.0
        %736 = vmatprep.subr.mxu0 0.0
        %737 = vmatpush1.msra.mxu0 0.0
        %738 = vmatprep.subr.mxu0 0.0
        %739 = vmatpush1.msra.mxu0 0.0
        %740 = vmatprep.mubr.f32.mxu0 0.0
        %741 = vmatmul.mubr.f32.gmra.mrb[0].mxu0 %v670
        %v742 = vpop.f32.mrb[0].mxu0
        %v743 = vadd.f32 0.0, %v742
        %v744 = vpop.f32.mrb[0].mxu0
        %v745 = vadd.f32 0.0, %v744
        %746 = vdwg.mxu0
        %v747 = vadd.f32 %v665, %v743
        %v748 = vadd.f32 %v666, %v745
        %749 = vrot.lane.b32.xlu0 %v249, 1
        %v750 = vpop.permute.xlu0 %749
        %751 = vrot.lane.b32.xlu0 %v250, 1
        %v752 = vpop.permute.xlu0 %751
        %v753 = vsel %vm584, %v750, %v752
        %v757 = vmul.f32 %v252, %v750
        %v758 = vmul.f32 %v254, %v753
        %v759 = vmul.f32 %v752, 0.0
        %s760 = scalar_lea.vmem %s2, 20
        %v761 = vld [vmem:[%s760] sm:$0xf]
        %765 = vrot.lane.b32.xlu0 %v757, 127
        %v766 = vpop.permute.xlu0 %765
        %767 = vrot.lane.b32.xlu0 %v758, 127
        %v768 = vpop.permute.xlu0 %767
        %769 = vrot.lane.b32.xlu0 %v759, 127
        %v770 = vpop.permute.xlu0 %769
        %v771 = vsel %vm565, %v766, %v768
        %v772 = vsel %vm565, %v768, %v770
        %v774 = vsel %vm283, %v761, 0
        %v776 = vsel %vm287, %v771, 0
        %v778 = vsel %vm287, %v772, 0
        %780 = vmatprep.subr.mxu0 %v778
        %781 = vmatpush1.msra.mxu0 %v776
        %782 = vmatprep.subr.mxu0 0.0
        %783 = vmatpush1.msra.mxu0 0.0
        %784 = vmatprep.subr.mxu0 0.0
        %785 = vmatpush1.msra.mxu0 0.0
        %786 = vmatprep.subr.mxu0 0.0
        %787 = vmatpush1.msra.mxu0 0.0
        %788 = vmatprep.subr.mxu0 0.0
        %789 = vmatpush1.msra.mxu0 0.0
        %790 = vmatprep.subr.mxu0 0.0
        %791 = vmatpush1.msra.mxu0 0.0
        %792 = vmatprep.subr.mxu0 0.0
        %793 = vmatpush1.msra.mxu0 0.0
        %794 = vmatprep.subr.mxu0 0.0
        %795 = vmatpush1.msra.mxu0 0.0
        %796 = vmatprep.subr.mxu0 0.0
        %797 = vmatpush1.msra.mxu0 0.0
        %798 = vmatprep.subr.mxu0 0.0
        %799 = vmatpush1.msra.mxu0 0.0
        %800 = vmatprep.subr.mxu0 0.0
        %801 = vmatpush1.msra.mxu0 0.0
        %802 = vmatprep.subr.mxu0 0.0
        %803 = vmatpush1.msra.mxu0 0.0
        %804 = vmatprep.subr.mxu0 0.0
        %805 = vmatpush1.msra.mxu0 0.0
        %806 = vmatprep.subr.mxu0 0.0
        %807 = vmatpush1.msra.mxu0 0.0
        %808 = vmatprep.subr.mxu0 0.0
        %809 = vmatpush1.msra.mxu0 0.0
        %810 = vmatprep.subr.mxu0 0.0
        %811 = vmatpush1.msra.mxu0 0.0
        %812 = vmatprep.subr.mxu0 0.0
        %813 = vmatpush1.msra.mxu0 0.0
        %814 = vmatprep.subr.mxu0 0.0
        %815 = vmatpush1.msra.mxu0 0.0
        %816 = vmatprep.subr.mxu0 0.0
        %817 = vmatpush1.msra.mxu0 0.0
        %818 = vmatprep.subr.mxu0 0.0
        %819 = vmatpush1.msra.mxu0 0.0
        %820 = vmatprep.subr.mxu0 0.0
        %821 = vmatpush1.msra.mxu0 0.0
        %822 = vmatprep.subr.mxu0 0.0
        %823 = vmatpush1.msra.mxu0 0.0
        %824 = vmatprep.subr.mxu0 0.0
        %825 = vmatpush1.msra.mxu0 0.0
        %826 = vmatprep.subr.mxu0 0.0
        %827 = vmatpush1.msra.mxu0 0.0
        %828 = vmatprep.subr.mxu0 0.0
        %829 = vmatpush1.msra.mxu0 0.0
        %830 = vmatprep.subr.mxu0 0.0
        %831 = vmatpush1.msra.mxu0 0.0
        %832 = vmatprep.subr.mxu0 0.0
        %833 = vmatpush1.msra.mxu0 0.0
        %834 = vmatprep.subr.mxu0 0.0
        %835 = vmatpush1.msra.mxu0 0.0
        %836 = vmatprep.subr.mxu0 0.0
        %837 = vmatpush1.msra.mxu0 0.0
        %838 = vmatprep.subr.mxu0 0.0
        %839 = vmatpush1.msra.mxu0 0.0
        %840 = vmatprep.subr.mxu0 0.0
        %841 = vmatpush1.msra.mxu0 0.0
        %842 = vmatprep.subr.mxu0 0.0
        %843 = vmatpush1.msra.mxu0 0.0
        %844 = vmatprep.mubr.f32.mxu0 0.0
        %845 = vmatmul.mubr.f32.gmra.mrb[0].mxu0 %v774
        %v846 = vpop.f32.mrb[0].mxu0
        %v847 = vadd.f32 0.0, %v846
        %v848 = vpop.f32.mrb[0].mxu0
        %v849 = vadd.f32 0.0, %v848
        %850 = vdwg.mxu0
        %v851 = vadd.f32 %v747, %v847
        %v852 = vadd.f32 %v748, %v849
        %853 = vrot.lane.b32.xlu0 %v245, 15
        %v854 = vpop.permute.xlu0 %853
        %855 = vrot.lane.b32.xlu0 %v246, 15
        %v856 = vpop.permute.xlu0 %855
        %v857 = vsel %vm478, %v854, %v856
        %v861 = vmul.f32 %v252, %v854
        %v862 = vmul.f32 %v254, %v857
        %v863 = vmul.f32 %v856, 0.0
        %s864 = scalar_lea.vmem %s2, 24
        %v865 = vld [vmem:[%s864] sm:$0xf]
        %869 = vrot.lane.b32.xlu0 %v861, 113
        %v870 = vpop.permute.xlu0 %869
        %871 = vrot.lane.b32.xlu0 %v862, 113
        %v872 = vpop.permute.xlu0 %871
        %873 = vrot.lane.b32.xlu0 %v863, 113
        %v874 = vpop.permute.xlu0 %873
        %v875 = vsel %vm459, %v870, %v872
        %v876 = vsel %vm459, %v872, %v874
        %v878 = vsel %vm283, %v865, 0
        %v880 = vsel %vm287, %v875, 0
        %v882 = vsel %vm287, %v876, 0
        %884 = vmatprep.subr.mxu0 %v882
        %885 = vmatpush1.msra.mxu0 %v880
        %886 = vmatprep.subr.mxu0 0.0
        %887 = vmatpush1.msra.mxu0 0.0
        %888 = vmatprep.subr.mxu0 0.0
        %889 = vmatpush1.msra.mxu0 0.0
        %890 = vmatprep.subr.mxu0 0.0
        %891 = vmatpush1.msra.mxu0 0.0
        %892 = vmatprep.subr.mxu0 0.0
        %893 = vmatpush1.msra.mxu0 0.0
        %894 = vmatprep.subr.mxu0 0.0
        %895 = vmatpush1.msra.mxu0 0.0
        %896 = vmatprep.subr.mxu0 0.0
        %897 = vmatpush1.msra.mxu0 0.0
        %898 = vmatprep.subr.mxu0 0.0
        %899 = vmatpush1.msra.mxu0 0.0
        %900 = vmatprep.subr.mxu0 0.0
        %901 = vmatpush1.msra.mxu0 0.0
        %902 = vmatprep.subr.mxu0 0.0
        %903 = vmatpush1.msra.mxu0 0.0
        %904 = vmatprep.subr.mxu0 0.0
        %905 = vmatpush1.msra.mxu0 0.0
        %906 = vmatprep.subr.mxu0 0.0
        %907 = vmatpush1.msra.mxu0 0.0
        %908 = vmatprep.subr.mxu0 0.0
        %909 = vmatpush1.msra.mxu0 0.0
        %910 = vmatprep.subr.mxu0 0.0
        %911 = vmatpush1.msra.mxu0 0.0
        %912 = vmatprep.subr.mxu0 0.0
        %913 = vmatpush1.msra.mxu0 0.0
        %914 = vmatprep.subr.mxu0 0.0
        %915 = vmatpush1.msra.mxu0 0.0
        %916 = vmatprep.subr.mxu0 0.0
        %917 = vmatpush1.msra.mxu0 0.0
        %918 = vmatprep.subr.mxu0 0.0
        %919 = vmatpush1.msra.mxu0 0.0
        %920 = vmatprep.subr.mxu0 0.0
        %921 = vmatpush1.msra.mxu0 0.0
        %922 = vmatprep.subr.mxu0 0.0
        %923 = vmatpush1.msra.mxu0 0.0
        %924 = vmatprep.subr.mxu0 0.0
        %925 = vmatpush1.msra.mxu0 0.0
        %926 = vmatprep.subr.mxu0 0.0
        %927 = vmatpush1.msra.mxu0 0.0
        %928 = vmatprep.subr.mxu0 0.0
        %929 = vmatpush1.msra.mxu0 0.0
        %930 = vmatprep.subr.mxu0 0.0
        %931 = vmatpush1.msra.mxu0 0.0
        %932 = vmatprep.subr.mxu0 0.0
        %933 = vmatpush1.msra.mxu0 0.0
        %934 = vmatprep.subr.mxu0 0.0
        %935 = vmatpush1.msra.mxu0 0.0
        %936 = vmatprep.subr.mxu0 0.0
        %937 = vmatpush1.msra.mxu0 0.0
        %938 = vmatprep.subr.mxu0 0.0
        %939 = vmatpush1.msra.mxu0 0.0
        %940 = vmatprep.subr.mxu0 0.0
        %941 = vmatpush1.msra.mxu0 0.0
        %942 = vmatprep.subr.mxu0 0.0
        %943 = vmatpush1.msra.mxu0 0.0
        %944 = vmatprep.subr.mxu0 0.0
        %945 = vmatpush1.msra.mxu0 0.0
        %946 = vmatprep.subr.mxu0 0.0
        %947 = vmatpush1.msra.mxu0 0.0
        %948 = vmatprep.mubr.f32.mxu0 0.0
        %949 = vmatmul.mubr.f32.gmra.mrb[0].mxu0 %v878
        %v950 = vpop.f32.mrb[0].mxu0
        %v951 = vadd.f32 0.0, %v950
        %v952 = vpop.f32.mrb[0].mxu0
        %v953 = vadd.f32 0.0, %v952
        %954 = vdwg.mxu0
        %v955 = vadd.f32 %v851, %v951
        %v956 = vadd.f32 %v852, %v953
        %s957 = scalar_lea.vmem %s2, 28
        %v958 = vld [vmem:[%s957] sm:$0xf]
        %959 = vrot.lane.b32.xlu0 %v252, 112
        %v960 = vpop.permute.xlu0 %959
        %961 = vrot.lane.b32.xlu0 %v254, 112
        %v962 = vpop.permute.xlu0 %961
        %963 = vrot.lane.b32.xlu0 0.0, 112
        %v964 = vpop.permute.xlu0 %963
        %vm965 = vcmask 916480
        %v966 = vsel %vm965, %v960, %v962
        %v967 = vsel %vm965, %v962, %v964
        %v969 = vsel %vm283, %v958, 0
        %v971 = vsel %vm287, %v966, 0
        %v973 = vsel %vm287, %v967, 0
        %975 = vmatprep.subr.mxu0 %v973
        %976 = vmatpush1.msra.mxu0 %v971
        %977 = vmatprep.subr.mxu0 0.0
        %978 = vmatpush1.msra.mxu0 0.0
        %979 = vmatprep.subr.mxu0 0.0
        %980 = vmatpush1.msra.mxu0 0.0
        %981 = vmatprep.subr.mxu0 0.0
        %982 = vmatpush1.msra.mxu0 0.0
        %983 = vmatprep.subr.mxu0 0.0
        %984 = vmatpush1.msra.mxu0 0.0
        %985 = vmatprep.subr.mxu0 0.0
        %986 = vmatpush1.msra.mxu0 0.0
        %987 = vmatprep.subr.mxu0 0.0
        %988 = vmatpush1.msra.mxu0 0.0
        %989 = vmatprep.subr.mxu0 0.0
        %990 = vmatpush1.msra.mxu0 0.0
        %991 = vmatprep.subr.mxu0 0.0
        %992 = vmatpush1.msra.mxu0 0.0
        %993 = vmatprep.subr.mxu0 0.0
        %994 = vmatpush1.msra.mxu0 0.0
        %995 = vmatprep.subr.mxu0 0.0
        %996 = vmatpush1.msra.mxu0 0.0
        %997 = vmatprep.subr.mxu0 0.0
        %998 = vmatpush1.msra.mxu0 0.0
        %999 = vmatprep.subr.mxu0 0.0
        %1000 = vmatpush1.msra.mxu0 0.0
        %1001 = vmatprep.subr.mxu0 0.0
        %1002 = vmatpush1.msra.mxu0 0.0
        %1003 = vmatprep.subr.mxu0 0.0
        %1004 = vmatpush1.msra.mxu0 0.0
        %1005 = vmatprep.subr.mxu0 0.0
        %1006 = vmatpush1.msra.mxu0 0.0
        %1007 = vmatprep.subr.mxu0 0.0
        %1008 = vmatpush1.msra.mxu0 0.0
        %1009 = vmatprep.subr.mxu0 0.0
        %1010 = vmatpush1.msra.mxu0 0.0
        %1011 = vmatprep.subr.mxu0 0.0
        %1012 = vmatpush1.msra.mxu0 0.0
        %1013 = vmatprep.subr.mxu0 0.0
        %1014 = vmatpush1.msra.mxu0 0.0
        %1015 = vmatprep.subr.mxu0 0.0
        %1016 = vmatpush1.msra.mxu0 0.0
        %1017 = vmatprep.subr.mxu0 0.0
        %1018 = vmatpush1.msra.mxu0 0.0
        %1019 = vmatprep.subr.mxu0 0.0
        %1020 = vmatpush1.msra.mxu0 0.0
        %1021 = vmatprep.subr.mxu0 0.0
        %1022 = vmatpush1.msra.mxu0 0.0
        %1023 = vmatprep.subr.mxu0 0.0
        %1024 = vmatpush1.msra.mxu0 0.0
        %1025 = vmatprep.subr.mxu0 0.0
        %1026 = vmatpush1.msra.mxu0 0.0
        %1027 = vmatprep.subr.mxu0 0.0
        %1028 = vmatpush1.msra.mxu0 0.0
        %1029 = vmatprep.subr.mxu0 0.0
        %1030 = vmatpush1.msra.mxu0 0.0
        %1031 = vmatprep.subr.mxu0 0.0
        %1032 = vmatpush1.msra.mxu0 0.0
        %1033 = vmatprep.subr.mxu0 0.0
        %1034 = vmatpush1.msra.mxu0 0.0
        %1035 = vmatprep.subr.mxu0 0.0
        %1036 = vmatpush1.msra.mxu0 0.0
        %1037 = vmatprep.subr.mxu0 0.0
        %1038 = vmatpush1.msra.mxu0 0.0
        %1039 = vmatprep.mubr.f32.mxu0 0.0
        %1040 = vmatmul.mubr.f32.gmra.mrb[0].mxu0 %v969
        %v1041 = vpop.f32.mrb[0].mxu0
        %v1042 = vadd.f32 0.0, %v1041
        %v1043 = vpop.f32.mrb[0].mxu0
        %v1044 = vadd.f32 0.0, %v1043
        %1045 = vdwg.mxu0
        %v1046 = vadd.f32 %v955, %v1042
        %v1047 = vadd.f32 %v956, %v1044
        %1048 = vrot.lane.b32.xlu0 %v249, 17
        %v1049 = vpop.permute.xlu0 %1048
        %1050 = vrot.lane.b32.xlu0 %v250, 17
        %v1051 = vpop.permute.xlu0 %1050
        %v1052 = vsel %vm372, %v1049, %v1051
        %v1056 = vmul.f32 %v252, %v1049
        %v1057 = vmul.f32 %v254, %v1052
        %v1058 = vmul.f32 %v1051, 0.0
        %s1059 = scalar_lea.vmem %s2, 32
        %v1060 = vld [vmem:[%s1059] sm:$0xf]
        %1064 = vrot.lane.b32.xlu0 %v1056, 111
        %v1065 = vpop.permute.xlu0 %1064
        %1066 = vrot.lane.b32.xlu0 %v1057, 111
        %v1067 = vpop.permute.xlu0 %1066
        %1068 = vrot.lane.b32.xlu0 %v1058, 111
        %v1069 = vpop.permute.xlu0 %1068
        %v1070 = vsel %vm262, %v1065, %v1067
        %v1071 = vsel %vm262, %v1067, %v1069
        %v1073 = vsel %vm283, %v1060, 0
        %v1075 = vsel %vm287, %v1070, 0
        %v1077 = vsel %vm287, %v1071, 0
        %1079 = vmatprep.subr.mxu0 %v1077
        %1080 = vmatpush1.msra.mxu0 %v1075
        %1081 = vmatprep.subr.mxu0 0.0
        %1082 = vmatpush1.msra.mxu0 0.0
        %1083 = vmatprep.subr.mxu0 0.0
        %1084 = vmatpush1.msra.mxu0 0.0
        %1085 = vmatprep.subr.mxu0 0.0
        %1086 = vmatpush1.msra.mxu0 0.0
        %1087 = vmatprep.subr.mxu0 0.0
        %1088 = vmatpush1.msra.mxu0 0.0
        %1089 = vmatprep.subr.mxu0 0.0
        %1090 = vmatpush1.msra.mxu0 0.0
        %1091 = vmatprep.subr.mxu0 0.0
        %1092 = vmatpush1.msra.mxu0 0.0
        %1093 = vmatprep.subr.mxu0 0.0
        %1094 = vmatpush1.msra.mxu0 0.0
        %1095 = vmatprep.subr.mxu0 0.0
        %1096 = vmatpush1.msra.mxu0 0.0
        %1097 = vmatprep.subr.mxu0 0.0
        %1098 = vmatpush1.msra.mxu0 0.0
        %1099 = vmatprep.subr.mxu0 0.0
        %1100 = vmatpush1.msra.mxu0 0.0
        %1101 = vmatprep.subr.mxu0 0.0
        %1102 = vmatpush1.msra.mxu0 0.0
        %1103 = vmatprep.subr.mxu0 0.0
        %1104 = vmatpush1.msra.mxu0 0.0
        %1105 = vmatprep.subr.mxu0 0.0
        %1106 = vmatpush1.msra.mxu0 0.0
        %1107 = vmatprep.subr.mxu0 0.0
        %1108 = vmatpush1.msra.mxu0 0.0
        %1109 = vmatprep.subr.mxu0 0.0
        %1110 = vmatpush1.msra.mxu0 0.0
        %1111 = vmatprep.subr.mxu0 0.0
        %1112 = vmatpush1.msra.mxu0 0.0
        %1113 = vmatprep.subr.mxu0 0.0
        %1114 = vmatpush1.msra.mxu0 0.0
        %1115 = vmatprep.subr.mxu0 0.0
        %1116 = vmatpush1.msra.mxu0 0.0
        %1117 = vmatprep.subr.mxu0 0.0
        %1118 = vmatpush1.msra.mxu0 0.0
        %1119 = vmatprep.subr.mxu0 0.0
        %1120 = vmatpush1.msra.mxu0 0.0
        %1121 = vmatprep.subr.mxu0 0.0
        %1122 = vmatpush1.msra.mxu0 0.0
        %1123 = vmatprep.subr.mxu0 0.0
        %1124 = vmatpush1.msra.mxu0 0.0
        %1125 = vmatprep.subr.mxu0 0.0
        %1126 = vmatpush1.msra.mxu0 0.0
        %1127 = vmatprep.subr.mxu0 0.0
        %1128 = vmatpush1.msra.mxu0 0.0
        %1129 = vmatprep.subr.mxu0 0.0
        %1130 = vmatpush1.msra.mxu0 0.0
        %1131 = vmatprep.subr.mxu0 0.0
        %1132 = vmatpush1.msra.mxu0 0.0
        %1133 = vmatprep.subr.mxu0 0.0
        %1134 = vmatpush1.msra.mxu0 0.0
        %1135 = vmatprep.subr.mxu0 0.0
        %1136 = vmatpush1.msra.mxu0 0.0
        %1137 = vmatprep.subr.mxu0 0.0
        %1138 = vmatpush1.msra.mxu0 0.0
        %1139 = vmatprep.subr.mxu0 0.0
        %1140 = vmatpush1.msra.mxu0 0.0
        %1141 = vmatprep.subr.mxu0 0.0
        %1142 = vmatpush1.msra.mxu0 0.0
        %1143 = vmatprep.mubr.f32.mxu0 0.0
        %1144 = vmatmul.mubr.f32.gmra.mrb[0].mxu0 %v1073
        %v1145 = vpop.f32.mrb[0].mxu0
        %v1146 = vadd.f32 0.0, %v1145
        %v1147 = vpop.f32.mrb[0].mxu0
        %v1148 = vadd.f32 0.0, %v1147
        %1149 = vdwg.mxu0
        %v1150 = vadd.f32 %v1046, %v1146
        %v1151 = vadd.f32 %v1047, %v1148
        %v1152 = vstv %s211
        %v1153 = vadd.f32 %v1150, %v1152
        %v1154 = vadd.f32 %v1151, %v1152
        %v1155 = vmax.f32 %v1153, 0.0
        %v1156 = vmax.f32 %v1154, 0.0
        %v1157 = vstv %s212
        %v1158 = vadd.f32 %v1155, %v1157
        %v1159 = vadd.f32 %v1156, %v1157
        %v1160 = vmul.f32 %v1158, %v263
        %v1161 = vmul.f32 %v1159, %v261
        %v1162 = vld [vmem:[%s3] sm:$0xf]
        %s1163 = scalar_lea.vmem %s3, 4
        %v1164 = vld [vmem:[%s1163] sm:$0xf]
        %1167 = vrot.lane.b32.xlu0 %v1158, 16
        %v1168 = vpop.permute.xlu0 %1167
        %1169 = vrot.lane.b32.xlu0 %v1159, 16
        %v1170 = vpop.permute.xlu0 %1169
        %v1171 = vsel %vm280, %v275, %v1168
        %v1172 = vsel %vm280, %v1168, %v1170
        %v1174 = vsel %vm283, %v1164, 0
        %v1176 = vsel %vm287, %v1171, 0
        %v1178 = vsel %vm287, %v1172, 0
        %1180 = vmatprep.subr.mxu0 %v1178
        %1181 = vmatpush1.msra.mxu0 %v1176
        %1182 = vmatprep.subr.mxu0 0.0
        %1183 = vmatpush1.msra.mxu0 0.0
        %1184 = vmatprep.subr.mxu0 0.0
        %1185 = vmatpush1.msra.mxu0 0.0
        %1186 = vmatprep.subr.mxu0 0.0
        %1187 = vmatpush1.msra.mxu0 0.0
        %1188 = vmatprep.subr.mxu0 0.0
        %1189 = vmatpush1.msra.mxu0 0.0
        %1190 = vmatprep.subr.mxu0 0.0
        %1191 = vmatpush1.msra.mxu0 0.0
        %1192 = vmatprep.subr.mxu0 0.0
        %1193 = vmatpush1.msra.mxu0 0.0
        %1194 = vmatprep.subr.mxu0 0.0
        %1195 = vmatpush1.msra.mxu0 0.0
        %1196 = vmatprep.subr.mxu0 0.0
        %1197 = vmatpush1.msra.mxu0 0.0
        %1198 = vmatprep.subr.mxu0 0.0
        %1199 = vmatpush1.msra.mxu0 0.0
        %1200 = vmatprep.subr.mxu0 0.0
        %1201 = vmatpush1.msra.mxu0 0.0
        %1202 = vmatprep.subr.mxu0 0.0
        %1203 = vmatpush1.msra.mxu0 0.0
        %1204 = vmatprep.subr.mxu0 0.0
        %1205 = vmatpush1.msra.mxu0 0.0
        %1206 = vmatprep.subr.mxu0 0.0
        %1207 = vmatpush1.msra.mxu0 0.0
        %1208 = vmatprep.subr.mxu0 0.0
        %1209 = vmatpush1.msra.mxu0 0.0
        %1210 = vmatprep.subr.mxu0 0.0
        %1211 = vmatpush1.msra.mxu0 0.0
        %1212 = vmatprep.subr.mxu0 0.0
        %1213 = vmatpush1.msra.mxu0 0.0
        %1214 = vmatprep.subr.mxu0 0.0
        %1215 = vmatpush1.msra.mxu0 0.0
        %1216 = vmatprep.subr.mxu0 0.0
        %1217 = vmatpush1.msra.mxu0 0.0
        %1218 = vmatprep.subr.mxu0 0.0
        %1219 = vmatpush1.msra.mxu0 0.0
        %1220 = vmatprep.subr.mxu0 0.0
        %1221 = vmatpush1.msra.mxu0 0.0
        %1222 = vmatprep.subr.mxu0 0.0
        %1223 = vmatpush1.msra.mxu0 0.0
        %1224 = vmatprep.subr.mxu0 0.0
        %1225 = vmatpush1.msra.mxu0 0.0
        %1226 = vmatprep.subr.mxu0 0.0
        %1227 = vmatpush1.msra.mxu0 0.0
        %1228 = vmatprep.subr.mxu0 0.0
        %1229 = vmatpush1.msra.mxu0 0.0
        %1230 = vmatprep.subr.mxu0 0.0
        %1231 = vmatpush1.msra.mxu0 0.0
        %1232 = vmatprep.subr.mxu0 0.0
        %1233 = vmatpush1.msra.mxu0 0.0
        %1234 = vmatprep.subr.mxu0 0.0
        %1235 = vmatpush1.msra.mxu0 0.0
        %1236 = vmatprep.subr.mxu0 0.0
        %1237 = vmatpush1.msra.mxu0 0.0
        %1238 = vmatprep.subr.mxu0 0.0
        %1239 = vmatpush1.msra.mxu0 0.0
        %1240 = vmatprep.subr.mxu0 0.0
        %1241 = vmatpush1.msra.mxu0 0.0
        %1242 = vmatprep.subr.mxu0 0.0
        %1243 = vmatpush1.msra.mxu0 0.0
        %1244 = vmatprep.mubr.f32.mxu0 0.0
        %1245 = vmatmul.mubr.f32.gmra.mrb[0].mxu0 %v1174
        %v1246 = vpop.f32.mrb[0].mxu0
        %v1247 = vadd.f32 0.0, %v1246
        %v1248 = vpop.f32.mrb[0].mxu0
        %v1249 = vadd.f32 0.0, %v1248
        %1250 = vdwg.mxu0
        %1253 = vrot.lane.b32.xlu0 %v1160, 17
        %v1254 = vpop.permute.xlu0 %1253
        %1255 = vrot.lane.b32.xlu0 %v1161, 17
        %v1256 = vpop.permute.xlu0 %1255
        %v1257 = vsel %vm372, %v367, %v1254
        %v1258 = vsel %vm372, %v1254, %v1256
        %v1260 = vsel %vm283, %v1162, 0
        %v1262 = vsel %vm287, %v1257, 0
        %v1264 = vsel %vm287, %v1258, 0
        %1266 = vmatprep.subr.mxu0 %v1264
        %1267 = vmatpush1.msra.mxu0 %v1262
        %1268 = vmatprep.subr.mxu0 0.0
        %1269 = vmatpush1.msra.mxu0 0.0
        %1270 = vmatprep.subr.mxu0 0.0
        %1271 = vmatpush1.msra.mxu0 0.0
        %1272 = vmatprep.subr.mxu0 0.0
        %1273 = vmatpush1.msra.mxu0 0.0
        %1274 = vmatprep.subr.mxu0 0.0
        %1275 = vmatpush1.msra.mxu0 0.0
        %1276 = vmatprep.subr.mxu0 0.0
        %1277 = vmatpush1.msra.mxu0 0.0
        %1278 = vmatprep.subr.mxu0 0.0
        %1279 = vmatpush1.msra.mxu0 0.0
        %1280 = vmatprep.subr.mxu0 0.0
        %1281 = vmatpush1.msra.mxu0 0.0
        %1282 = vmatprep.subr.mxu0 0.0
        %1283 = vmatpush1.msra.mxu0 0.0
        %1284 = vmatprep.subr.mxu0 0.0
        %1285 = vmatpush1.msra.mxu0 0.0
        %1286 = vmatprep.subr.mxu0 0.0
        %1287 = vmatpush1.msra.mxu0 0.0
        %1288 = vmatprep.subr.mxu0 0.0
        %1289 = vmatpush1.msra.mxu0 0.0
        %1290 = vmatprep.subr.mxu0 0.0
        %1291 = vmatpush1.msra.mxu0 0.0
        %1292 = vmatprep.subr.mxu0 0.0
        %1293 = vmatpush1.msra.mxu0 0.0
        %1294 = vmatprep.subr.mxu0 0.0
        %1295 = vmatpush1.msra.mxu0 0.0
        %1296 = vmatprep.subr.mxu0 0.0
        %1297 = vmatpush1.msra.mxu0 0.0
        %1298 = vmatprep.subr.mxu0 0.0
        %1299 = vmatpush1.msra.mxu0 0.0
        %1300 = vmatprep.subr.mxu0 0.0
        %1301 = vmatpush1.msra.mxu0 0.0
        %1302 = vmatprep.subr.mxu0 0.0
        %1303 = vmatpush1.msra.mxu0 0.0
        %1304 = vmatprep.subr.mxu0 0.0
        %1305 = vmatpush1.msra.mxu0 0.0
        %1306 = vmatprep.subr.mxu0 0.0
        %1307 = vmatpush1.msra.mxu0 0.0
        %1308 = vmatprep.subr.mxu0 0.0
        %1309 = vmatpush1.msra.mxu0 0.0
        %1310 = vmatprep.subr.mxu0 0.0
        %1311 = vmatpush1.msra.mxu0 0.0
        %1312 = vmatprep.subr.mxu0 0.0
        %1313 = vmatpush1.msra.mxu0 0.0
        %1314 = vmatprep.subr.mxu0 0.0
        %1315 = vmatpush1.msra.mxu0 0.0
        %1316 = vmatprep.subr.mxu0 0.0
        %1317 = vmatpush1.msra.mxu0 0.0
        %1318 = vmatprep.subr.mxu0 0.0
        %1319 = vmatpush1.msra.mxu0 0.0
        %1320 = vmatprep.subr.mxu0 0.0
        %1321 = vmatpush1.msra.mxu0 0.0
        %1322 = vmatprep.subr.mxu0 0.0
        %1323 = vmatpush1.msra.mxu0 0.0
        %1324 = vmatprep.subr.mxu0 0.0
        %1325 = vmatpush1.msra.mxu0 0.0
        %1326 = vmatprep.subr.mxu0 0.0
        %1327 = vmatpush1.msra.mxu0 0.0
        %1328 = vmatprep.subr.mxu0 0.0
        %1329 = vmatpush1.msra.mxu0 0.0
        %1330 = vmatprep.mubr.f32.mxu0 0.0
        %1331 = vmatmul.mubr.f32.gmra.mrb[0].mxu0 %v1260
        %v1332 = vpop.f32.mrb[0].mxu0
        %v1333 = vadd.f32 %v1247, %v1332
        %v1334 = vpop.f32.mrb[0].mxu0
        %v1335 = vadd.f32 %v1249, %v1334
        %1336 = vdwg.mxu0
        %v1337 = vmul.f32 %v1158, %v460
        %v1338 = vmul.f32 %v1159, %v458
        %s1339 = scalar_lea.vmem %s3, 8
        %v1340 = vld [vmem:[%s1339] sm:$0xf]
        %1343 = vrot.lane.b32.xlu0 %v1337, 15
        %v1344 = vpop.permute.xlu0 %1343
        %1345 = vrot.lane.b32.xlu0 %v1338, 15
        %v1346 = vpop.permute.xlu0 %1345
        %v1347 = vsel %vm478, %v473, %v1344
        %v1348 = vsel %vm478, %v1344, %v1346
        %v1350 = vsel %vm283, %v1340, 0
        %v1352 = vsel %vm287, %v1347, 0
        %v1354 = vsel %vm287, %v1348, 0
        %1356 = vmatprep.subr.mxu0 %v1354
        %1357 = vmatpush1.msra.mxu0 %v1352
        %1358 = vmatprep.subr.mxu0 0.0
        %1359 = vmatpush1.msra.mxu0 0.0
        %1360 = vmatprep.subr.mxu0 0.0
        %1361 = vmatpush1.msra.mxu0 0.0
        %1362 = vmatprep.subr.mxu0 0.0
        %1363 = vmatpush1.msra.mxu0 0.0
        %1364 = vmatprep.subr.mxu0 0.0
        %1365 = vmatpush1.msra.mxu0 0.0
        %1366 = vmatprep.subr.mxu0 0.0
        %1367 = vmatpush1.msra.mxu0 0.0
        %1368 = vmatprep.subr.mxu0 0.0
        %1369 = vmatpush1.msra.mxu0 0.0
        %1370 = vmatprep.subr.mxu0 0.0
        %1371 = vmatpush1.msra.mxu0 0.0
        %1372 = vmatprep.subr.mxu0 0.0
        %1373 = vmatpush1.msra.mxu0 0.0
        %1374 = vmatprep.subr.mxu0 0.0
        %1375 = vmatpush1.msra.mxu0 0.0
        %1376 = vmatprep.subr.mxu0 0.0
        %1377 = vmatpush1.msra.mxu0 0.0
        %1378 = vmatprep.subr.mxu0 0.0
        %1379 = vmatpush1.msra.mxu0 0.0
        %1380 = vmatprep.subr.mxu0 0.0
        %1381 = vmatpush1.msra.mxu0 0.0
        %1382 = vmatprep.subr.mxu0 0.0
        %1383 = vmatpush1.msra.mxu0 0.0
        %1384 = vmatprep.subr.mxu0 0.0
        %1385 = vmatpush1.msra.mxu0 0.0
        %1386 = vmatprep.subr.mxu0 0.0
        %1387 = vmatpush1.msra.mxu0 0.0
        %1388 = vmatprep.subr.mxu0 0.0
        %1389 = vmatpush1.msra.mxu0 0.0
        %1390 = vmatprep.subr.mxu0 0.0
        %1391 = vmatpush1.msra.mxu0 0.0
        %1392 = vmatprep.subr.mxu0 0.0
        %1393 = vmatpush1.msra.mxu0 0.0
        %1394 = vmatprep.subr.mxu0 0.0
        %1395 = vmatpush1.msra.mxu0 0.0
        %1396 = vmatprep.subr.mxu0 0.0
        %1397 = vmatpush1.msra.mxu0 0.0
        %1398 = vmatprep.subr.mxu0 0.0
        %1399 = vmatpush1.msra.mxu0 0.0
        %1400 = vmatprep.subr.mxu0 0.0
        %1401 = vmatpush1.msra.mxu0 0.0
        %1402 = vmatprep.subr.mxu0 0.0
        %1403 = vmatpush1.msra.mxu0 0.0
        %1404 = vmatprep.subr.mxu0 0.0
        %1405 = vmatpush1.msra.mxu0 0.0
        %1406 = vmatprep.subr.mxu0 0.0
        %1407 = vmatpush1.msra.mxu0 0.0
        %1408 = vmatprep.subr.mxu0 0.0
        %1409 = vmatpush1.msra.mxu0 0.0
        %1410 = vmatprep.subr.mxu0 0.0
        %1411 = vmatpush1.msra.mxu0 0.0
        %1412 = vmatprep.subr.mxu0 0.0
        %1413 = vmatpush1.msra.mxu0 0.0
        %1414 = vmatprep.subr.mxu0 0.0
        %1415 = vmatpush1.msra.mxu0 0.0
        %1416 = vmatprep.subr.mxu0 0.0
        %1417 = vmatpush1.msra.mxu0 0.0
        %1418 = vmatprep.subr.mxu0 0.0
        %1419 = vmatpush1.msra.mxu0 0.0
        %1420 = vmatprep.mubr.f32.mxu0 0.0
        %1421 = vmatmul.mubr.f32.gmra.mrb[0].mxu0 %v1350
        %v1422 = vpop.f32.mrb[0].mxu0
        %v1423 = vadd.f32 0.0, %v1422
        %v1424 = vpop.f32.mrb[0].mxu0
        %v1425 = vadd.f32 0.0, %v1424
        %1426 = vdwg.mxu0
        %v1427 = vadd.f32 %v1333, %v1423
        %v1428 = vadd.f32 %v1335, %v1425
        %v1429 = vmul.f32 %v1158, %v566
        %v1430 = vmul.f32 %v1159, %v564
        %s1431 = scalar_lea.vmem %s3, 12
        %v1432 = vld [vmem:[%s1431] sm:$0xf]
        %1435 = vrot.lane.b32.xlu0 %v1429, 1
        %v1436 = vpop.permute.xlu0 %1435
        %1437 = vrot.lane.b32.xlu0 %v1430, 1
        %v1438 = vpop.permute.xlu0 %1437
        %v1439 = vsel %vm584, %v579, %v1436
        %v1440 = vsel %vm584, %v1436, %v1438
        %v1442 = vsel %vm283, %v1432, 0
        %v1444 = vsel %vm287, %v1439, 0
        %v1446 = vsel %vm287, %v1440, 0
        %1448 = vmatprep.subr.mxu0 %v1446
        %1449 = vmatpush1.msra.mxu0 %v1444
        %1450 = vmatprep.subr.mxu0 0.0
        %1451 = vmatpush1.msra.mxu0 0.0
        %1452 = vmatprep.subr.mxu0 0.0
        %1453 = vmatpush1.msra.mxu0 0.0
        %1454 = vmatprep.subr.mxu0 0.0
        %1455 = vmatpush1.msra.mxu0 0.0
        %1456 = vmatprep.subr.mxu0 0.0
        %1457 = vmatpush1.msra.mxu0 0.0
        %1458 = vmatprep.subr.mxu0 0.0
        %1459 = vmatpush1.msra.mxu0 0.0
        %1460 = vmatprep.subr.mxu0 0.0
        %1461 = vmatpush1.msra.mxu0 0.0
        %1462 = vmatprep.subr.mxu0 0.0
        %1463 = vmatpush1.msra.mxu0 0.0
        %1464 = vmatprep.subr.mxu0 0.0
        %1465 = vmatpush1.msra.mxu0 0.0
        %1466 = vmatprep.subr.mxu0 0.0
        %1467 = vmatpush1.msra.mxu0 0.0
        %1468 = vmatprep.subr.mxu0 0.0
        %1469 = vmatpush1.msra.mxu0 0.0
        %1470 = vmatprep.subr.mxu0 0.0
        %1471 = vmatpush1.msra.mxu0 0.0
        %1472 = vmatprep.subr.mxu0 0.0
        %1473 = vmatpush1.msra.mxu0 0.0
        %1474 = vmatprep.subr.mxu0 0.0
        %1475 = vmatpush1.msra.mxu0 0.0
        %1476 = vmatprep.subr.mxu0 0.0
        %1477 = vmatpush1.msra.mxu0 0.0
        %1478 = vmatprep.subr.mxu0 0.0
        %1479 = vmatpush1.msra.mxu0 0.0
        %1480 = vmatprep.subr.mxu0 0.0
        %1481 = vmatpush1.msra.mxu0 0.0
        %1482 = vmatprep.subr.mxu0 0.0
        %1483 = vmatpush1.msra.mxu0 0.0
        %1484 = vmatprep.subr.mxu0 0.0
        %1485 = vmatpush1.msra.mxu0 0.0
        %1486 = vmatprep.subr.mxu0 0.0
        %1487 = vmatpush1.msra.mxu0 0.0
        %1488 = vmatprep.subr.mxu0 0.0
        %1489 = vmatpush1.msra.mxu0 0.0
        %1490 = vmatprep.subr.mxu0 0.0
        %1491 = vmatpush1.msra.mxu0 0.0
        %1492 = vmatprep.subr.mxu0 0.0
        %1493 = vmatpush1.msra.mxu0 0.0
        %1494 = vmatprep.subr.mxu0 0.0
        %1495 = vmatpush1.msra.mxu0 0.0
        %1496 = vmatprep.subr.mxu0 0.0
        %1497 = vmatpush1.msra.mxu0 0.0
        %1498 = vmatprep.subr.mxu0 0.0
        %1499 = vmatpush1.msra.mxu0 0.0
        %1500 = vmatprep.subr.mxu0 0.0
        %1501 = vmatpush1.msra.mxu0 0.0
        %1502 = vmatprep.subr.mxu0 0.0
        %1503 = vmatpush1.msra.mxu0 0.0
        %1504 = vmatprep.subr.mxu0 0.0
        %1505 = vmatpush1.msra.mxu0 0.0
        %1506 = vmatprep.subr.mxu0 0.0
        %1507 = vmatpush1.msra.mxu0 0.0
        %1508 = vmatprep.subr.mxu0 0.0
        %1509 = vmatpush1.msra.mxu0 0.0
        %1510 = vmatprep.subr.mxu0 0.0
        %1511 = vmatpush1.msra.mxu0 0.0
        %1512 = vmatprep.mubr.f32.mxu0 0.0
        %1513 = vmatmul.mubr.f32.gmra.mrb[0].mxu0 %v1442
        %v1514 = vpop.f32.mrb[0].mxu0
        %v1515 = vadd.f32 0.0, %v1514
        %v1516 = vpop.f32.mrb[0].mxu0
        %v1517 = vadd.f32 0.0, %v1516
        %1518 = vdwg.mxu0
        %v1519 = vadd.f32 %v1427, %v1515
        %v1520 = vadd.f32 %v1428, %v1517
        %s1521 = scalar_lea.vmem %s3, 16
        %v1522 = vld [vmem:[%s1521] sm:$0xf]
        %v1524 = vsel %vm283, %v1522, 0
        %v1526 = vsel %vm287, %v1158, 0
        %v1528 = vsel %vm287, %v1159, 0
        %1530 = vmatprep.subr.mxu0 %v1528
        %1531 = vmatpush1.msra.mxu0 %v1526
        %1532 = vmatprep.subr.mxu0 0.0
        %1533 = vmatpush1.msra.mxu0 0.0
        %1534 = vmatprep.subr.mxu0 0.0
        %1535 = vmatpush1.msra.mxu0 0.0
        %1536 = vmatprep.subr.mxu0 0.0
        %1537 = vmatpush1.msra.mxu0 0.0
        %1538 = vmatprep.subr.mxu0 0.0
        %1539 = vmatpush1.msra.mxu0 0.0
        %1540 = vmatprep.subr.mxu0 0.0
        %1541 = vmatpush1.msra.mxu0 0.0
        %1542 = vmatprep.subr.mxu0 0.0
        %1543 = vmatpush1.msra.mxu0 0.0
        %1544 = vmatprep.subr.mxu0 0.0
        %1545 = vmatpush1.msra.mxu0 0.0
        %1546 = vmatprep.subr.mxu0 0.0
        %1547 = vmatpush1.msra.mxu0 0.0
        %1548 = vmatprep.subr.mxu0 0.0
        %1549 = vmatpush1.msra.mxu0 0.0
        %1550 = vmatprep.subr.mxu0 0.0
        %1551 = vmatpush1.msra.mxu0 0.0
        %1552 = vmatprep.subr.mxu0 0.0
        %1553 = vmatpush1.msra.mxu0 0.0
        %1554 = vmatprep.subr.mxu0 0.0
        %1555 = vmatpush1.msra.mxu0 0.0
        %1556 = vmatprep.subr.mxu0 0.0
        %1557 = vmatpush1.msra.mxu0 0.0
        %1558 = vmatprep.subr.mxu0 0.0
        %1559 = vmatpush1.msra.mxu0 0.0
        %1560 = vmatprep.subr.mxu0 0.0
        %1561 = vmatpush1.msra.mxu0 0.0
        %1562 = vmatprep.subr.mxu0 0.0
        %1563 = vmatpush1.msra.mxu0 0.0
        %1564 = vmatprep.subr.mxu0 0.0
        %1565 = vmatpush1.msra.mxu0 0.0
        %1566 = vmatprep.subr.mxu0 0.0
        %1567 = vmatpush1.msra.mxu0 0.0
        %1568 = vmatprep.subr.mxu0 0.0
        %1569 = vmatpush1.msra.mxu0 0.0
        %1570 = vmatprep.subr.mxu0 0.0
        %1571 = vmatpush1.msra.mxu0 0.0
        %1572 = vmatprep.subr.mxu0 0.0
        %1573 = vmatpush1.msra.mxu0 0.0
        %1574 = vmatprep.subr.mxu0 0.0
        %1575 = vmatpush1.msra.mxu0 0.0
        %1576 = vmatprep.subr.mxu0 0.0
        %1577 = vmatpush1.msra.mxu0 0.0
        %1578 = vmatprep.subr.mxu0 0.0
        %1579 = vmatpush1.msra.mxu0 0.0
        %1580 = vmatprep.subr.mxu0 0.0
        %1581 = vmatpush1.msra.mxu0 0.0
        %1582 = vmatprep.subr.mxu0 0.0
        %1583 = vmatpush1.msra.mxu0 0.0
        %1584 = vmatprep.subr.mxu0 0.0
        %1585 = vmatpush1.msra.mxu0 0.0
        %1586 = vmatprep.subr.mxu0 0.0
        %1587 = vmatpush1.msra.mxu0 0.0
        %1588 = vmatprep.subr.mxu0 0.0
        %1589 = vmatpush1.msra.mxu0 0.0
        %1590 = vmatprep.subr.mxu0 0.0
        %1591 = vmatpush1.msra.mxu0 0.0
        %1592 = vmatprep.subr.mxu0 0.0
        %1593 = vmatpush1.msra.mxu0 0.0
        %1594 = vmatprep.mubr.f32.mxu0 0.0
        %1595 = vmatmul.mubr.f32.gmra.mrb[0].mxu0 %v1524
        %v1596 = vpop.f32.mrb[0].mxu0
        %v1597 = vadd.f32 0.0, %v1596
        %v1598 = vpop.f32.mrb[0].mxu0
        %v1599 = vadd.f32 0.0, %v1598
        %1600 = vdwg.mxu0
        %v1601 = vadd.f32 %v1519, %v1597
        %v1602 = vadd.f32 %v1520, %v1599
        %v1603 = vmul.f32 %v1158, %v750
        %v1604 = vmul.f32 %v1159, %v753
        %s1605 = scalar_lea.vmem %s3, 20
        %v1606 = vld [vmem:[%s1605] sm:$0xf]
        %1609 = vrot.lane.b32.xlu0 %v1603, 127
        %v1610 = vpop.permute.xlu0 %1609
        %1611 = vrot.lane.b32.xlu0 %v1604, 127
        %v1612 = vpop.permute.xlu0 %1611
        %v1613 = vsel %vm565, %v1610, %v1612
        %v1614 = vsel %vm565, %v1612, %v770
        %v1616 = vsel %vm283, %v1606, 0
        %v1618 = vsel %vm287, %v1613, 0
        %v1620 = vsel %vm287, %v1614, 0
        %1622 = vmatprep.subr.mxu0 %v1620
        %1623 = vmatpush1.msra.mxu0 %v1618
        %1624 = vmatprep.subr.mxu0 0.0
        %1625 = vmatpush1.msra.mxu0 0.0
        %1626 = vmatprep.subr.mxu0 0.0
        %1627 = vmatpush1.msra.mxu0 0.0
        %1628 = vmatprep.subr.mxu0 0.0
        %1629 = vmatpush1.msra.mxu0 0.0
        %1630 = vmatprep.subr.mxu0 0.0
        %1631 = vmatpush1.msra.mxu0 0.0
        %1632 = vmatprep.subr.mxu0 0.0
        %1633 = vmatpush1.msra.mxu0 0.0
        %1634 = vmatprep.subr.mxu0 0.0
        %1635 = vmatpush1.msra.mxu0 0.0
        %1636 = vmatprep.subr.mxu0 0.0
        %1637 = vmatpush1.msra.mxu0 0.0
        %1638 = vmatprep.subr.mxu0 0.0
        %1639 = vmatpush1.msra.mxu0 0.0
        %1640 = vmatprep.subr.mxu0 0.0
        %1641 = vmatpush1.msra.mxu0 0.0
        %1642 = vmatprep.subr.mxu0 0.0
        %1643 = vmatpush1.msra.mxu0 0.0
        %1644 = vmatprep.subr.mxu0 0.0
        %1645 = vmatpush1.msra.mxu0 0.0
        %1646 = vmatprep.subr.mxu0 0.0
        %1647 = vmatpush1.msra.mxu0 0.0
        %1648 = vmatprep.subr.mxu0 0.0
        %1649 = vmatpush1.msra.mxu0 0.0
        %1650 = vmatprep.subr.mxu0 0.0
        %1651 = vmatpush1.msra.mxu0 0.0
        %1652 = vmatprep.subr.mxu0 0.0
        %1653 = vmatpush1.msra.mxu0 0.0
        %1654 = vmatprep.subr.mxu0 0.0
        %1655 = vmatpush1.msra.mxu0 0.0
        %1656 = vmatprep.subr.mxu0 0.0
        %1657 = vmatpush1.msra.mxu0 0.0
        %1658 = vmatprep.subr.mxu0 0.0
        %1659 = vmatpush1.msra.mxu0 0.0
        %1660 = vmatprep.subr.mxu0 0.0
        %1661 = vmatpush1.msra.mxu0 0.0
        %1662 = vmatprep.subr.mxu0 0.0
        %1663 = vmatpush1.msra.mxu0 0.0
        %1664 = vmatprep.subr.mxu0 0.0
        %1665 = vmatpush1.msra.mxu0 0.0
        %1666 = vmatprep.subr.mxu0 0.0
        %1667 = vmatpush1.msra.mxu0 0.0
        %1668 = vmatprep.subr.mxu0 0.0
        %1669 = vmatpush1.msra.mxu0 0.0
        %1670 = vmatprep.subr.mxu0 0.0
        %1671 = vmatpush1.msra.mxu0 0.0
        %1672 = vmatprep.subr.mxu0 0.0
        %1673 = vmatpush1.msra.mxu0 0.0
        %1674 = vmatprep.subr.mxu0 0.0
        %1675 = vmatpush1.msra.mxu0 0.0
        %1676 = vmatprep.subr.mxu0 0.0
        %1677 = vmatpush1.msra.mxu0 0.0
        %1678 = vmatprep.subr.mxu0 0.0
        %1679 = vmatpush1.msra.mxu0 0.0
        %1680 = vmatprep.subr.mxu0 0.0
        %1681 = vmatpush1.msra.mxu0 0.0
        %1682 = vmatprep.subr.mxu0 0.0
        %1683 = vmatpush1.msra.mxu0 0.0
        %1684 = vmatprep.subr.mxu0 0.0
        %1685 = vmatpush1.msra.mxu0 0.0
        %1686 = vmatprep.mubr.f32.mxu0 0.0
        %1687 = vmatmul.mubr.f32.gmra.mrb[0].mxu0 %v1616
        %v1688 = vpop.f32.mrb[0].mxu0
        %v1689 = vadd.f32 0.0, %v1688
        %v1690 = vpop.f32.mrb[0].mxu0
        %v1691 = vadd.f32 0.0, %v1690
        %1692 = vdwg.mxu0
        %v1693 = vadd.f32 %v1601, %v1689
        %v1694 = vadd.f32 %v1602, %v1691
        %v1695 = vmul.f32 %v1158, %v854
        %v1696 = vmul.f32 %v1159, %v857
        %s1697 = scalar_lea.vmem %s3, 24
        %v1698 = vld [vmem:[%s1697] sm:$0xf]
        %1701 = vrot.lane.b32.xlu0 %v1695, 113
        %v1702 = vpop.permute.xlu0 %1701
        %1703 = vrot.lane.b32.xlu0 %v1696, 113
        %v1704 = vpop.permute.xlu0 %1703
        %v1705 = vsel %vm459, %v1702, %v1704
        %v1706 = vsel %vm459, %v1704, %v874
        %v1708 = vsel %vm283, %v1698, 0
        %v1710 = vsel %vm287, %v1705, 0
        %v1712 = vsel %vm287, %v1706, 0
        %1714 = vmatprep.subr.mxu0 %v1712
        %1715 = vmatpush1.msra.mxu0 %v1710
        %1716 = vmatprep.subr.mxu0 0.0
        %1717 = vmatpush1.msra.mxu0 0.0
        %1718 = vmatprep.subr.mxu0 0.0
        %1719 = vmatpush1.msra.mxu0 0.0
        %1720 = vmatprep.subr.mxu0 0.0
        %1721 = vmatpush1.msra.mxu0 0.0
        %1722 = vmatprep.subr.mxu0 0.0
        %1723 = vmatpush1.msra.mxu0 0.0
        %1724 = vmatprep.subr.mxu0 0.0
        %1725 = vmatpush1.msra.mxu0 0.0
        %1726 = vmatprep.subr.mxu0 0.0
        %1727 = vmatpush1.msra.mxu0 0.0
        %1728 = vmatprep.subr.mxu0 0.0
        %1729 = vmatpush1.msra.mxu0 0.0
        %1730 = vmatprep.subr.mxu0 0.0
        %1731 = vmatpush1.msra.mxu0 0.0
        %1732 = vmatprep.subr.mxu0 0.0
        %1733 = vmatpush1.msra.mxu0 0.0
        %1734 = vmatprep.subr.mxu0 0.0
        %1735 = vmatpush1.msra.mxu0 0.0
        %1736 = vmatprep.subr.mxu0 0.0
        %1737 = vmatpush1.msra.mxu0 0.0
        %1738 = vmatprep.subr.mxu0 0.0
        %1739 = vmatpush1.msra.mxu0 0.0
        %1740 = vmatprep.subr.mxu0 0.0
        %1741 = vmatpush1.msra.mxu0 0.0
        %1742 = vmatprep.subr.mxu0 0.0
        %1743 = vmatpush1.msra.mxu0 0.0
        %1744 = vmatprep.subr.mxu0 0.0
        %1745 = vmatpush1.msra.mxu0 0.0
        %1746 = vmatprep.subr.mxu0 0.0
        %1747 = vmatpush1.msra.mxu0 0.0
        %1748 = vmatprep.subr.mxu0 0.0
        %1749 = vmatpush1.msra.mxu0 0.0
        %1750 = vmatprep.subr.mxu0 0.0
        %1751 = vmatpush1.msra.mxu0 0.0
        %1752 = vmatprep.subr.mxu0 0.0
        %1753 = vmatpush1.msra.mxu0 0.0
        %1754 = vmatprep.subr.mxu0 0.0
        %1755 = vmatpush1.msra.mxu0 0.0
        %1756 = vmatprep.subr.mxu0 0.0
        %1757 = vmatpush1.msra.mxu0 0.0
        %1758 = vmatprep.subr.mxu0 0.0
        %1759 = vmatpush1.msra.mxu0 0.0
        %1760 = vmatprep.subr.mxu0 0.0
        %1761 = vmatpush1.msra.mxu0 0.0
        %1762 = vmatprep.subr.mxu0 0.0
        %1763 = vmatpush1.msra.mxu0 0.0
        %1764 = vmatprep.subr.mxu0 0.0
        %1765 = vmatpush1.msra.mxu0 0.0
        %1766 = vmatprep.subr.mxu0 0.0
        %1767 = vmatpush1.msra.mxu0 0.0
        %1768 = vmatprep.subr.mxu0 0.0
        %1769 = vmatpush1.msra.mxu0 0.0
        %1770 = vmatprep.subr.mxu0 0.0
        %1771 = vmatpush1.msra.mxu0 0.0
        %1772 = vmatprep.subr.mxu0 0.0
        %1773 = vmatpush1.msra.mxu0 0.0
        %1774 = vmatprep.subr.mxu0 0.0
        %1775 = vmatpush1.msra.mxu0 0.0
        %1776 = vmatprep.subr.mxu0 0.0
        %1777 = vmatpush1.msra.mxu0 0.0
        %1778 = vmatprep.mubr.f32.mxu0 0.0
        %1779 = vmatmul.mubr.f32.gmra.mrb[0].mxu0 %v1708
        %v1780 = vpop.f32.mrb[0].mxu0
        %v1781 = vadd.f32 0.0, %v1780
        %v1782 = vpop.f32.mrb[0].mxu0
        %v1783 = vadd.f32 0.0, %v1782
        %1784 = vdwg.mxu0
        %v1785 = vadd.f32 %v1693, %v1781
        %v1786 = vadd.f32 %v1694, %v1783
        %s1787 = scalar_lea.vmem %s3, 28
        %v1788 = vld [vmem:[%s1787] sm:$0xf]
        %1789 = vrot.lane.b32.xlu0 %v1158, 112
        %v1790 = vpop.permute.xlu0 %1789
        %1791 = vrot.lane.b32.xlu0 %v1159, 112
        %v1792 = vpop.permute.xlu0 %1791
        %v1793 = vsel %vm965, %v1790, %v1792
        %v1794 = vsel %vm965, %v1792, %v964
        %v1796 = vsel %vm283, %v1788, 0
        %v1798 = vsel %vm287, %v1793, 0
        %v1800 = vsel %vm287, %v1794, 0
        %1802 = vmatprep.subr.mxu0 %v1800
        %1803 = vmatpush1.msra.mxu0 %v1798
        %1804 = vmatprep.subr.mxu0 0.0
        %1805 = vmatpush1.msra.mxu0 0.0
        %1806 = vmatprep.subr.mxu0 0.0
        %1807 = vmatpush1.msra.mxu0 0.0
        %1808 = vmatprep.subr.mxu0 0.0
        %1809 = vmatpush1.msra.mxu0 0.0
        %1810 = vmatprep.subr.mxu0 0.0
        %1811 = vmatpush1.msra.mxu0 0.0
        %1812 = vmatprep.subr.mxu0 0.0
        %1813 = vmatpush1.msra.mxu0 0.0
        %1814 = vmatprep.subr.mxu0 0.0
        %1815 = vmatpush1.msra.mxu0 0.0
        %1816 = vmatprep.subr.mxu0 0.0
        %1817 = vmatpush1.msra.mxu0 0.0
        %1818 = vmatprep.subr.mxu0 0.0
        %1819 = vmatpush1.msra.mxu0 0.0
        %1820 = vmatprep.subr.mxu0 0.0
        %1821 = vmatpush1.msra.mxu0 0.0
        %1822 = vmatprep.subr.mxu0 0.0
        %1823 = vmatpush1.msra.mxu0 0.0
        %1824 = vmatprep.subr.mxu0 0.0
        %1825 = vmatpush1.msra.mxu0 0.0
        %1826 = vmatprep.subr.mxu0 0.0
        %1827 = vmatpush1.msra.mxu0 0.0
        %1828 = vmatprep.subr.mxu0 0.0
        %1829 = vmatpush1.msra.mxu0 0.0
        %1830 = vmatprep.subr.mxu0 0.0
        %1831 = vmatpush1.msra.mxu0 0.0
        %1832 = vmatprep.subr.mxu0 0.0
        %1833 = vmatpush1.msra.mxu0 0.0
        %1834 = vmatprep.subr.mxu0 0.0
        %1835 = vmatpush1.msra.mxu0 0.0
        %1836 = vmatprep.subr.mxu0 0.0
        %1837 = vmatpush1.msra.mxu0 0.0
        %1838 = vmatprep.subr.mxu0 0.0
        %1839 = vmatpush1.msra.mxu0 0.0
        %1840 = vmatprep.subr.mxu0 0.0
        %1841 = vmatpush1.msra.mxu0 0.0
        %1842 = vmatprep.subr.mxu0 0.0
        %1843 = vmatpush1.msra.mxu0 0.0
        %1844 = vmatprep.subr.mxu0 0.0
        %1845 = vmatpush1.msra.mxu0 0.0
        %1846 = vmatprep.subr.mxu0 0.0
        %1847 = vmatpush1.msra.mxu0 0.0
        %1848 = vmatprep.subr.mxu0 0.0
        %1849 = vmatpush1.msra.mxu0 0.0
        %1850 = vmatprep.subr.mxu0 0.0
        %1851 = vmatpush1.msra.mxu0 0.0
        %1852 = vmatprep.subr.mxu0 0.0
        %1853 = vmatpush1.msra.mxu0 0.0
        %1854 = vmatprep.subr.mxu0 0.0
        %1855 = vmatpush1.msra.mxu0 0.0
        %1856 = vmatprep.subr.mxu0 0.0
        %1857 = vmatpush1.msra.mxu0 0.0
        %1858 = vmatprep.subr.mxu0 0.0
        %1859 = vmatpush1.msra.mxu0 0.0
        %1860 = vmatprep.subr.mxu0 0.0
        %1861 = vmatpush1.msra.mxu0 0.0
        %1862 = vmatprep.subr.mxu0 0.0
        %1863 = vmatpush1.msra.mxu0 0.0
        %1864 = vmatprep.subr.mxu0 0.0
        %1865 = vmatpush1.msra.mxu0 0.0
        %1866 = vmatprep.mubr.f32.mxu0 0.0
        %1867 = vmatmul.mubr.f32.gmra.mrb[0].mxu0 %v1796
        %v1868 = vpop.f32.mrb[0].mxu0
        %v1869 = vadd.f32 0.0, %v1868
        %v1870 = vpop.f32.mrb[0].mxu0
        %v1871 = vadd.f32 0.0, %v1870
        %1872 = vdwg.mxu0
        %v1873 = vadd.f32 %v1785, %v1869
        %v1874 = vadd.f32 %v1786, %v1871
        %v1875 = vmul.f32 %v1158, %v1049
        %v1876 = vmul.f32 %v1159, %v1052
        %s1877 = scalar_lea.vmem %s3, 32
        %v1878 = vld [vmem:[%s1877] sm:$0xf]
        %1881 = vrot.lane.b32.xlu0 %v1875, 111
        %v1882 = vpop.permute.xlu0 %1881
        %1883 = vrot.lane.b32.xlu0 %v1876, 111
        %v1884 = vpop.permute.xlu0 %1883
        %v1885 = vsel %vm262, %v1882, %v1884
        %v1886 = vsel %vm262, %v1884, %v1069
        %v1888 = vsel %vm283, %v1878, 0
        %v1890 = vsel %vm287, %v1885, 0
        %v1892 = vsel %vm287, %v1886, 0
        %1894 = vmatprep.subr.mxu0 %v1892
        %1895 = vmatpush1.msra.mxu0 %v1890
        %1896 = vmatprep.subr.mxu0 0.0
        %1897 = vmatpush1.msra.mxu0 0.0
        %1898 = vmatprep.subr.mxu0 0.0
        %1899 = vmatpush1.msra.mxu0 0.0
        %1900 = vmatprep.subr.mxu0 0.0
        %1901 = vmatpush1.msra.mxu0 0.0
        %1902 = vmatprep.subr.mxu0 0.0
        %1903 = vmatpush1.msra.mxu0 0.0
        %1904 = vmatprep.subr.mxu0 0.0
        %1905 = vmatpush1.msra.mxu0 0.0
        %1906 = vmatprep.subr.mxu0 0.0
        %1907 = vmatpush1.msra.mxu0 0.0
        %1908 = vmatprep.subr.mxu0 0.0
        %1909 = vmatpush1.msra.mxu0 0.0
        %1910 = vmatprep.subr.mxu0 0.0
        %1911 = vmatpush1.msra.mxu0 0.0
        %1912 = vmatprep.subr.mxu0 0.0
        %1913 = vmatpush1.msra.mxu0 0.0
        %1914 = vmatprep.subr.mxu0 0.0
        %1915 = vmatpush1.msra.mxu0 0.0
        %1916 = vmatprep.subr.mxu0 0.0
        %1917 = vmatpush1.msra.mxu0 0.0
        %1918 = vmatprep.subr.mxu0 0.0
        %1919 = vmatpush1.msra.mxu0 0.0
        %1920 = vmatprep.subr.mxu0 0.0
        %1921 = vmatpush1.msra.mxu0 0.0
        %1922 = vmatprep.subr.mxu0 0.0
        %1923 = vmatpush1.msra.mxu0 0.0
        %1924 = vmatprep.subr.mxu0 0.0
        %1925 = vmatpush1.msra.mxu0 0.0
        %1926 = vmatprep.subr.mxu0 0.0
        %1927 = vmatpush1.msra.mxu0 0.0
        %1928 = vmatprep.subr.mxu0 0.0
        %1929 = vmatpush1.msra.mxu0 0.0
        %1930 = vmatprep.subr.mxu0 0.0
        %1931 = vmatpush1.msra.mxu0 0.0
        %1932 = vmatprep.subr.mxu0 0.0
        %1933 = vmatpush1.msra.mxu0 0.0
        %1934 = vmatprep.subr.mxu0 0.0
        %1935 = vmatpush1.msra.mxu0 0.0
        %1936 = vmatprep.subr.mxu0 0.0
        %1937 = vmatpush1.msra.mxu0 0.0
        %1938 = vmatprep.subr.mxu0 0.0
        %1939 = vmatpush1.msra.mxu0 0.0
        %1940 = vmatprep.subr.mxu0 0.0
        %1941 = vmatpush1.msra.mxu0 0.0
        %1942 = vmatprep.subr.mxu0 0.0
        %1943 = vmatpush1.msra.mxu0 0.0
        %1944 = vmatprep.subr.mxu0 0.0
        %1945 = vmatpush1.msra.mxu0 0.0
        %1946 = vmatprep.subr.mxu0 0.0
        %1947 = vmatpush1.msra.mxu0 0.0
        %1948 = vmatprep.subr.mxu0 0.0
        %1949 = vmatpush1.msra.mxu0 0.0
        %1950 = vmatprep.subr.mxu0 0.0
        %1951 = vmatpush1.msra.mxu0 0.0
        %1952 = vmatprep.subr.mxu0 0.0
        %1953 = vmatpush1.msra.mxu0 0.0
        %1954 = vmatprep.subr.mxu0 0.0
        %1955 = vmatpush1.msra.mxu0 0.0
        %1956 = vmatprep.subr.mxu0 0.0
        %1957 = vmatpush1.msra.mxu0 0.0
        %1958 = vmatprep.mubr.f32.mxu0 0.0
        %1959 = vmatmul.mubr.f32.gmra.mrb[0].mxu0 %v1888
        %v1960 = vpop.f32.mrb[0].mxu0
        %v1961 = vadd.f32 0.0, %v1960
        %v1962 = vpop.f32.mrb[0].mxu0
        %v1963 = vadd.f32 0.0, %v1962
        %1964 = vdwg.mxu0
        %v1965 = vadd.f32 %v1873, %v1961
        %v1966 = vadd.f32 %v1874, %v1963
        %v1967 = vstv %s214
        %v1968 = vmul.f32 %v1965, %v1967
        %v1969 = vmul.f32 %v1966, %v1967
        %v1970 = vstv %s213
        %v1971 = vadd.f32 %v1968, %v1970
        %v1972 = vadd.f32 %v1969, %v1970
        %v1974 = vcombine.high %v215, %v215
        %v1976 = vadd.f32 %v1971, %v215
        %v1977 = vadd.f32 %v1972, %v1974
        %v1978 = vmax.f32 %v1976, 0.0
        %v1979 = vmax.f32 %v1977, 0.0
        %v1982 = vcombine.low %v1978, %v1979
        %1984 = vst [vmem:[%s204] sm:$0xff] %v1982
        %s1985 = sand.u32 %s116, 1
        %s1986 = scalar_lea.sflag [#allocation3], %s1985
        %s1987 = sand.u32 %s116, 1
        %s1988 = smul.addr %s1987, 8
        %s1989 = scalar_lea.vmem [#allocation5], %s1988
        // Predicated region
        $region41: #{tpu_custom_call.1} parent=35 // pred_check
          %p1990 = pneg %p126
        $region42: #{tpu_custom_call.1} parent=35 // pred_check_branch
          %1992 = sbr.rel (%p1990) target = $region44
        $region43: #{tpu_custom_call.1} parent=35 // pred_region
          %s1994 = ssub.s32 128, 128
          %1995 = vsyncadd %s1986, %s1994
          %s1996 = smul.addr %s19, 2
          %s1997 = smul.addr %s1996, 64
          %s1998 = scalar_lea.hbm %s4, %s1997
          %s2000 = sshll.u32 %s1989, 4
          %s2001 = int_to_ptr.vmem [resolvable:$true] %s2000
          %2003 = dma.vmem_to_hbm [thread:$0]  %s2001, 128, %s1998, %s1986
        $region44: #{tpu_custom_call.1} parent=35 // pred_fallthru
          _
      $region36: #{tpu_custom_call.1} parent=5 // pred_fallthru
        _
      %p2004 = scmp.le.s32.totalorder 2, %s14
      // Predicated region
      $region45: #{tpu_custom_call.1} parent=5 // pred_check
        %p2005 = pneg %p2004
      $region46: #{tpu_custom_call.1} parent=5 // pred_check_branch
        %2007 = sbr.rel (%p2005) target = $region48
      $region47: #{tpu_custom_call.1} parent=5 // pred_region
        %s2008 = ssub.s32 %s14, 2
        // Predicated region
        $region49: #{tpu_custom_call.1} parent=47 // pred_check
          %p2009 = pneg %p132
        $region50: #{tpu_custom_call.1} parent=47 // pred_check_branch
          %2011 = sbr.rel (%p2009) target = $region52
        $region51: #{tpu_custom_call.1} parent=47 // pred_region
          %s2012 = sand.u32 %s117, 1
          %s2013 = scalar_lea.sflag [#allocation3], %s2012
          %s2014 = sand.u32 %s117, 1
          %s2015 = smul.addr %s2014, 8
          %s2016 = scalar_lea.vmem [#allocation5], %s2015
          %2017 = dma.done %s2013, 128
        $region52: #{tpu_custom_call.1} parent=47 // pred_fallthru
          _
      $region48: #{tpu_custom_call.1} parent=5 // pred_fallthru
        _
    $region6: #{tpu_custom_call.1} parent=1 // loop_footer
      %s18 = sadd.s32 1, %s14
    $region7: #{tpu_custom_call.1} parent=1 // loop_footer_branch
      %13 = sbr.rel target = $region3
    $region8: #{tpu_custom_call.1} parent=1 // loop_exit
      _
    %2018 = vsyncpa [#allocation3], 1
    %s2019 = scalar_lea.sflag [#allocation3], 1
    %2020 = vsyncpa %s2019, 1
    %2021 = vsyncpa [#allocation4], 1
    %s2022 = scalar_lea.sflag [#allocation4], 1
    %2023 = vsyncpa %s2022, 1

</llo_original>
